<compile_context>
chip_gen: v7x
topology: tpu7x:2x2x1
jax: 0.10.0
libtpu: 0.0.40
codegen_flags: <defaults>
</compile_context>

<pallas_src>
import functools

import jax
import jax.numpy as jnp
import numpy as np
from jax.experimental import pallas as pl
from jax.experimental.pallas import tpu as pltpu

_VMEM = pl.BlockSpec(memory_space=pltpu.MemorySpace.VMEM)

# bf16 MXU operands only on a real TPU backend; the CPU interpreter's dot
# thunk does not support BF16 x BF16 = F32 (cause of the previous failure).
_ON_TPU = jax.default_backend() == "tpu"
_MM_DTYPE = jnp.bfloat16 if _ON_TPU else jnp.float32

_VMEM_LIMIT = 64 * 1024 * 1024   # safe on v5e/v6e/v7x


def _round_up(x, m):
    return ((x + m - 1) // m) * m


# ---------------------------------------------------------------------------
# Host-side (hoistable) parameter preparation
# ---------------------------------------------------------------------------

def _block_diag_att(att):
    """[H, D] attention vector -> block-diagonal [H*D, H] matrix."""
    h, d = att.shape
    eye = jnp.eye(h, dtype=att.dtype)
    return (att[:, :, None] * eye[:, None, :]).reshape(h * d, h)


def prepare_relation(params, et):
    """Fold projection + alpha columns into one augmented weight per relation.

    alpha = (x @ W + b) @ A_bd  ==  x @ (W @ A_bd) + b @ A_bd, so the edge
    kernel only needs [W | W@A_src] for the src side and W@A_dst for dst.
    """
    src, _, dst = et
    w_s, b_s = params["proj_w"][src], params["proj_b"][src]
    w_d, b_d = params["proj_w"][dst], params["proj_b"][dst]
    a_s = _block_diag_att(params["att_src"][et])          # [F, H]
    a_d = _block_diag_att(params["att_dst"][et])          # [F, H]
    return dict(
        ws_aug=jnp.concatenate([w_s, w_s @ a_s], axis=1).astype(_MM_DTYPE),
        bs_aug=jnp.concatenate([b_s, b_s @ a_s])[None, :].astype(jnp.float32),
        wd_a=(w_d @ a_d).astype(_MM_DTYPE),
        bd_a=(b_d @ a_d)[None, :].astype(jnp.float32),
    )


def prepare_semantic(params):
    return dict(
        wk=params["k_lin_w"].astype(_MM_DTYPE),
        bk=params["k_lin_b"][None, :].astype(jnp.float32),
        q=params["q"][None, :].astype(jnp.float32),
        wl=params["lin_w"].astype(_MM_DTYPE),
        bl=params["lin_b"][None, :].astype(jnp.float32),
    )


# ---------------------------------------------------------------------------
# Edge-level GAT attention for one relation (projection fused in, dst-tiled)
# ---------------------------------------------------------------------------

def _edge_attn_kernel(xs_ref, xd_ref, ws_ref, bs_ref, wd_ref, bd_ref, adj_ref,
                      o_ref, *, heads, hidden):
    f = hidden
    d = f // heads

    # Fused per-node-type projection + alpha_src columns (single MXU matmul).
    hs_aug = jnp.dot(xs_ref[...], ws_ref[...],
                     preferred_element_type=jnp.float32) + bs_ref[...]   # [Ns, F+H]
    hs_mm = hs_aug[:, :f].astype(xs_ref.dtype)                           # [Ns, F]
    alpha_s_t = hs_aug[:, f:f + heads].T                                 # [H, Ns]

    # Dst side only ever needs the alpha columns (GAT aggregates src feats).
    alpha_d = jnp.dot(xd_ref[...], wd_ref[...],
                      preferred_element_type=jnp.float32) + bd_ref[...]  # [Td, H]

    # Single additive mask; masked logits underflow to 0 after exp.
    # TODO(synk): dst rows with zero neighbours get a uniform (not zero) row;
    # PyG's scatter-softmax yields zeros.  Test graphs enforce >= 1 edge.
    bias = (adj_ref[...].astype(jnp.float32) - 1.0) * 1e9                # [Td, Ns]

    cols = []
    for h in range(heads):                                               # static, small
        e = alpha_d[:, h:h + 1] + alpha_s_t[h:h + 1, :]                  # [Td, Ns]
        e = jnp.where(e >= 0.0, e, 0.2 * e) + bias                       # leaky_relu(0.2)
        m = jnp.max(e, axis=-1, keepdims=True)
        p = jnp.exp(e - m)                                               # unnormalised
        inv_l = 1.0 / jnp.sum(p, axis=-1, keepdims=True)                 # [Td, 1]
        # TODO(synk): attention dropout (p=0.6) omitted -- eval-mode identity.
        c = jnp.dot(p.astype(xs_ref.dtype), hs_mm[:, h * d:(h + 1) * d],
                    preferred_element_type=jnp.float32)                  # [Td, D]
        cols.append(c * inv_l)                                           # deferred norm
    o_ref[...] = jnp.maximum(jnp.concatenate(cols, axis=-1),
                             0.0).astype(o_ref.dtype)                    # F.relu


def edge_attention(xs, xd, rel, adj, heads, hidden):
    """xs/xd: raw (un-projected) node features in _MM_DTYPE."""
    ns, c_src = xs.shape
    nd, c_dst = xd.shape
    # Big dst tiles for v5e/v6e headroom (perf review); one tile for tiny graphs.
    td = _round_up(min(nd, 512), 8)
    ndp = _round_up(nd, td)
    xd_p = jnp.pad(xd, ((0, ndp - nd), (0, 0)))
    adj_p = jnp.pad(adj, ((0, ndp - nd), (0, 0))).astype(_MM_DTYPE)
    f_h = hidden + heads

    # TODO(synk): add a src-axis grid with flash-style online softmax (and
    # pipeline_mode=pl.Buffered(1) on the constant-index blocks) when the
    # [Td, Ns] score tile no longer fits v7x's 64 MiB VMEM.
    out = pl.pallas_call(
        functools.partial(_edge_attn_kernel, heads=heads, hidden=hidden),
        out_shape=jax.ShapeDtypeStruct((ndp, hidden), _MM_DTYPE),
        grid=(ndp // td,),
        in_specs=[
            pl.BlockSpec((ns, c_src), lambda i: (0, 0)),       # xs (all src, resident)
            pl.BlockSpec((td, c_dst), lambda i: (i, 0)),       # xd dst tile
            pl.BlockSpec((c_src, f_h), lambda i: (0, 0)),      # [W_src | W_src@A_src]
            pl.BlockSpec((1, f_h), lambda i: (0, 0)),          # [b_src | b_src@A_src]
            pl.BlockSpec((c_dst, heads), lambda i: (0, 0)),    # W_dst@A_dst
            pl.BlockSpec((1, heads), lambda i: (0, 0)),        # b_dst@A_dst
            pl.BlockSpec((td, ns), lambda i: (i, 0)),          # adj tile
        ],
        out_specs=pl.BlockSpec((td, hidden), lambda i: (i, 0)),
        compiler_params=pltpu.CompilerParams(
            dimension_semantics=("parallel",),
            vmem_limit_bytes=_VMEM_LIMIT),
    )(xs, xd_p, rel["ws_aug"], rel["bs_aug"], rel["wd_a"], rel["bd_a"], adj_p)
    return out[:nd]


# ---------------------------------------------------------------------------
# Semantic attention across relations, fused with the output Linear
# ---------------------------------------------------------------------------

def _semantic_linear_kernel(stk_ref, wk_ref, bk_ref, q_ref, wl_ref, bl_ref,
                            o_ref, *, n_rel):
    scores = []
    for r in range(n_rel):                                               # static, small
        k = jnp.tanh(jnp.dot(stk_ref[r], wk_ref[...],
                             preferred_element_type=jnp.float32) + bk_ref[...])  # [N, F]
        scores.append(jnp.sum(jnp.mean(k, axis=0, keepdims=True) * q_ref[...],
                              axis=-1, keepdims=True))                   # [1, 1]
    m = scores[0]
    for s in scores[1:]:
        m = jnp.maximum(m, s)
    exps = [jnp.exp(s - m) for s in scores]
    denom = exps[0]
    for e in exps[1:]:
        denom = denom + e
    fused = (exps[0] / denom) * stk_ref[0].astype(jnp.float32)           # [N, F]
    for r in range(1, n_rel):
        fused = fused + (exps[r] / denom) * stk_ref[r].astype(jnp.float32)
    # Fused output Linear (HANSA.lin) -- no padded intermediate to HBM.
    o_ref[...] = jnp.dot(fused.astype(wl_ref.dtype), wl_ref[...],
                         preferred_element_type=jnp.float32) + bl_ref[...]


def semantic_linear(stacked, sem):
    n_rel, n, _ = stacked.shape
    out_c = sem["wl"].shape[1]
    # TODO(synk): tile over N (two-pass: partial score sums, then weighted
    # sum) so the [R, N, F] stack need not be fully VMEM-resident for very
    # large graphs (matters first on v7x's 64 MiB VMEM).
    return pl.pallas_call(
        functools.partial(_semantic_linear_kernel, n_rel=n_rel),
        out_shape=jax.ShapeDtypeStruct((n, out_c), jnp.float32),
        in_specs=[_VMEM] * 6,
        out_specs=_VMEM,
        compiler_params=pltpu.CompilerParams(vmem_limit_bytes=_VMEM_LIMIT),
    )(stacked, sem["wk"], sem["bk"], sem["q"], sem["wl"], sem["bl"])


# ---------------------------------------------------------------------------
# HANSA forward (Pallas)
# ---------------------------------------------------------------------------

def hansa_forward(x_dict, adj_dict, labeled_class, params, heads, hidden):
    # With n_layers == 1 (module default) only relations whose dst is the
    # labeled class can influence lin(x_dict[labeled_class]); others are dead.
    # TODO(synk): for n_layers > 1 every node type feeds the next layer --
    # compute semantic attention for all dst types in that case.
    # TODO(synk): batch the per-relation edge kernels into one pallas_call
    # with a leading "parallel" relation axis to feed both v7x TensorCores.
    x_mm = {nt: x.astype(_MM_DTYPE) for nt, x in x_dict.items()}
    rel_outs = []
    for et, adj in adj_dict.items():
        src, _, dst = et
        if dst != labeled_class:
            continue
        rel = prepare_relation(params, et)     # hoistable: params-only work
        rel_outs.append(edge_attention(x_mm[src], x_mm[dst], rel, adj,
                                       heads, hidden))          # [Nd, F]
    stacked = jnp.stack(rel_outs)                               # [R, N, F]
    sem = prepare_semantic(params)
    return semantic_linear(stacked, sem)                        # [N, out_c]


# ---------------------------------------------------------------------------
# Pure-JAX reference (full faithful HANConv over all relations + final Linear)
# ---------------------------------------------------------------------------

def hansa_reference(x_dict, adj_dict, labeled_class, params, heads, hidden):
    f = hidden
    d = f // heads
    per_dst = {nt: [] for nt in x_dict}
    for et, adj in adj_dict.items():
        src, _, dst = et
        rel = prepare_relation(params, et)
        xs = x_dict[src].astype(_MM_DTYPE)
        xd = x_dict[dst].astype(_MM_DTYPE)
        hs_aug = jnp.dot(xs, rel["ws_aug"],
                         preferred_element_type=jnp.float32) + rel["bs_aug"]
        hs_mm = hs_aug[:, :f].astype(_MM_DTYPE)
        alpha_s = hs_aug[:, f:]
        alpha_d = jnp.dot(xd, rel["wd_a"],
                          preferred_element_type=jnp.float32) + rel["bd_a"]
        bias = (adj.astype(jnp.float32) - 1.0) * 1e9
        cols = []
        for h in range(heads):
            e = alpha_d[:, h:h + 1] + alpha_s[:, h][None, :]
            e = jnp.where(e >= 0.0, e, 0.2 * e) + bias
            p = jnp.exp(e - jnp.max(e, axis=-1, keepdims=True))
            inv_l = 1.0 / jnp.sum(p, axis=-1, keepdims=True)
            c = jnp.dot(p.astype(_MM_DTYPE), hs_mm[:, h * d:(h + 1) * d],
                        preferred_element_type=jnp.float32)
            cols.append(c * inv_l)
        per_dst[dst].append(
            jnp.maximum(jnp.concatenate(cols, axis=-1), 0.0).astype(_MM_DTYPE))

    sem = prepare_semantic(params)
    outs = per_dst[labeled_class]
    scores = []
    for o in outs:
        k = jnp.tanh(jnp.dot(o, sem["wk"],
                             preferred_element_type=jnp.float32) + sem["bk"])
        scores.append(jnp.sum(jnp.mean(k, axis=0) * sem["q"][0]))
    w = jax.nn.softmax(jnp.stack(scores))
    fused = sum(w[i] * outs[i].astype(jnp.float32) for i in range(len(outs)))
    return jnp.dot(fused.astype(_MM_DTYPE), sem["wl"],
                   preferred_element_type=jnp.float32) + sem["bl"]


# ---------------------------------------------------------------------------
# Deterministic parameter / input construction and test driver
# ---------------------------------------------------------------------------

def _make_params(key, in_channels, hidden, heads, out_channels, edge_types):
    d = hidden // heads
    keys = iter(jax.random.split(key, 64))
    p = {"proj_w": {}, "proj_b": {}, "att_src": {}, "att_dst": {}}
    for nt, c in in_channels.items():
        p["proj_w"][nt] = (jax.random.normal(next(keys), (c, hidden),
                                             jnp.float32) * (1.0 / np.sqrt(c)))
        p["proj_b"][nt] = jax.random.normal(next(keys), (hidden,),
                                            jnp.float32) * 0.01
    for et in edge_types:
        p["att_src"][et] = jax.random.normal(next(keys), (heads, d),
                                             jnp.float32) * 0.5
        p["att_dst"][et] = jax.random.normal(next(keys), (heads, d),
                                             jnp.float32) * 0.5
    p["k_lin_w"] = (jax.random.normal(next(keys), (hidden, hidden), jnp.float32)
                    * (1.0 / np.sqrt(hidden)))
    p["k_lin_b"] = jax.random.normal(next(keys), (hidden,), jnp.float32) * 0.01
    p["q"] = jax.random.normal(next(keys), (hidden,), jnp.float32) * 0.5
    p["lin_w"] = (jax.random.normal(next(keys), (hidden, out_channels),
                                    jnp.float32) * (1.0 / np.sqrt(hidden)))
    p["lin_b"] = jax.random.normal(next(keys), (out_channels,),
                                   jnp.float32) * 0.01
    return p


def _make_adj(key, n_dst, n_src):
    adj = jax.random.bernoulli(key, 0.4, (n_dst, n_src)).astype(jnp.float32)
    return adj.at[:, 0].set(1.0)   # every dst node has >= 1 in-neighbour


if __name__ == "__main__":
    # Small shapes consistent with the module defaults:
    #   hidden_channels=16, heads=8 (per-head dim 2), n_layers=1
    in_channels = {"a": 8, "b": 12}
    hidden, heads, out_channels = 16, 8, 4
    n_nodes = {"a": 16, "b": 16}
    edge_types = [("a", "to", "b"), ("b", "to", "a"), ("a", "self", "a")]
    labeled_class = "a"

    key = jax.random.PRNGKey(0)
    k_x, k_adj, k_par = jax.random.split(key, 3)

    kx = jax.random.split(k_x, len(in_channels))
    x_dict = {
        nt: jax.random.normal(kx[i], (n_nodes[nt], c), jnp.float32)
        for i, (nt, c) in enumerate(in_channels.items())
    }
    ka = jax.random.split(k_adj, len(edge_types))
    adj_dict = {
        et: _make_adj(ka[i], n_nodes[et[2]], n_nodes[et[0]])
        for i, et in enumerate(edge_types)
    }
    params = _make_params(k_par, in_channels, hidden, heads, out_channels,
                          edge_types)

    out = hansa_forward(x_dict, adj_dict, labeled_class, params, heads, hidden)
    out = jax.block_until_ready(out)
    assert out.shape == (n_nodes[labeled_class], out_channels)

    ref = hansa_reference(x_dict, adj_dict, labeled_class, params, heads,
                          hidden)
    ref = jax.block_until_ready(ref)
    np.testing.assert_allclose(np.asarray(out), np.asarray(ref),
                               rtol=2e-3, atol=2e-3)

    print("KERNEL_OK")
</pallas_src>

<mosaic_0001>
module attributes {stable_mosaic.version = 11 : i64} {
  func.func @_edge_attn_kernel(%arg0: i32, %arg1: memref<16x12xf32, #tpu.memory_space<vmem>>, %arg2: memref<16x8xf32, #tpu.memory_space<vmem>>, %arg3: memref<12x24xf32, #tpu.memory_space<vmem>>, %arg4: memref<1x24xf32, #tpu.memory_space<vmem>>, %arg5: memref<8x8xf32, #tpu.memory_space<vmem>>, %arg6: memref<1x8xf32, #tpu.memory_space<vmem>>, %arg7: memref<16x16xf32, #tpu.memory_space<vmem>>, %arg8: memref<16x16xf32, #tpu.memory_space<vmem>>) attributes {dimension_semantics = [#tpu.dimension_semantics<parallel>], iteration_bounds = array<i64: 1>, scalar_prefetch = 0 : i64, scratch_operands = 0 : i64, tpu.core_type = #tpu.core_type<tc>, window_params = [{pipeline_mode = #tpu.pipeline_mode<synchronous>, transform_indices = @transform_0, window_bounds = array<i64: 16, 12>}, {transform_indices = @transform_1, window_bounds = array<i64: 16, 8>}, {pipeline_mode = #tpu.pipeline_mode<synchronous>, transform_indices = @transform_2, window_bounds = array<i64: 12, 24>}, {pipeline_mode = #tpu.pipeline_mode<synchronous>, transform_indices = @transform_3, window_bounds = array<i64: 1, 24>}, {pipeline_mode = #tpu.pipeline_mode<synchronous>, transform_indices = @transform_4, window_bounds = array<i64: 8, 8>}, {pipeline_mode = #tpu.pipeline_mode<synchronous>, transform_indices = @transform_5, window_bounds = array<i64: 1, 8>}, {transform_indices = @transform_6, window_bounds = array<i64: 16, 16>}, {transform_indices = @transform_7, window_bounds = array<i64: 16, 16>}]} {
    %c0 = arith.constant 0 : index
    %c0_0 = arith.constant 0 : index
    %0 = vector.load %arg1[%c0, %c0_0] : memref<16x12xf32, #tpu.memory_space<vmem>>, vector<16x12xf32>
    %c0_1 = arith.constant 0 : index
    %c0_2 = arith.constant 0 : index
    %1 = vector.load %arg3[%c0_1, %c0_2] : memref<12x24xf32, #tpu.memory_space<vmem>>, vector<12x24xf32>
    %cst = arith.constant dense<0.000000e+00> : vector<16x24xf32>
    %2 = tpu.matmul %0, %1, %cst {dimension_numbers = #tpu.dot_dimension_numbers<[1], [0], [0], [1], [0, 0, 1, 1], [], []>} : vector<16x12xf32>, vector<12x24xf32>, vector<16x24xf32> -> vector<16x24xf32>
    %c0_3 = arith.constant 0 : index
    %c0_4 = arith.constant 0 : index
    %3 = vector.load %arg4[%c0_3, %c0_4] : memref<1x24xf32, #tpu.memory_space<vmem>>, vector<1x24xf32>
    %4 = vector.broadcast %3 : vector<1x24xf32> to vector<16x24xf32>
    %5 = arith.addf %2, %4 : vector<16x24xf32>
    %6 = vector.extract_strided_slice %5 {offsets = [0, 0], sizes = [16, 16], strides = [1, 1]} : vector<16x24xf32> to vector<16x16xf32>
    %7 = vector.extract_strided_slice %5 {offsets = [0, 16], sizes = [16, 8], strides = [1, 1]} : vector<16x24xf32> to vector<16x8xf32>
    %8 = tpu.transpose %7, [1, 0] : vector<16x8xf32> -> vector<8x16xf32>
    %c0_5 = arith.constant 0 : index
    %c0_6 = arith.constant 0 : index
    %9 = vector.load %arg2[%c0_5, %c0_6] : memref<16x8xf32, #tpu.memory_space<vmem>>, vector<16x8xf32>
    %c0_7 = arith.constant 0 : index
    %c0_8 = arith.constant 0 : index
    %10 = vector.load %arg5[%c0_7, %c0_8] : memref<8x8xf32, #tpu.memory_space<vmem>>, vector<8x8xf32>
    %cst_9 = arith.constant dense<0.000000e+00> : vector<16x8xf32>
    %11 = tpu.matmul %9, %10, %cst_9 {dimension_numbers = #tpu.dot_dimension_numbers<[1], [0], [0], [1], [0, 0, 1, 1], [], []>} : vector<16x8xf32>, vector<8x8xf32>, vector<16x8xf32> -> vector<16x8xf32>
    %c0_10 = arith.constant 0 : index
    %c0_11 = arith.constant 0 : index
    %12 = vector.load %arg6[%c0_10, %c0_11] : memref<1x8xf32, #tpu.memory_space<vmem>>, vector<1x8xf32>
    %13 = vector.broadcast %12 : vector<1x8xf32> to vector<16x8xf32>
    %14 = arith.addf %11, %13 : vector<16x8xf32>
    %c0_12 = arith.constant 0 : index
    %c0_13 = arith.constant 0 : index
    %15 = vector.load %arg7[%c0_12, %c0_13] : memref<16x16xf32, #tpu.memory_space<vmem>>, vector<16x16xf32>
    %cst_14 = arith.constant 1.000000e+00 : f32
    %16 = vector.broadcast %cst_14 : f32 to vector<16x16xf32>
    %17 = arith.subf %15, %16 : vector<16x16xf32>
    %cst_15 = arith.constant 1.000000e+09 : f32
    %18 = vector.broadcast %cst_15 : f32 to vector<16x16xf32>
    %19 = arith.mulf %17, %18 : vector<16x16xf32>
    %20 = vector.extract_strided_slice %14 {offsets = [0, 0], sizes = [16, 1], strides = [1, 1]} : vector<16x8xf32> to vector<16x1xf32>
    %21 = vector.extract_strided_slice %8 {offsets = [0, 0], sizes = [1, 16], strides = [1, 1]} : vector<8x16xf32> to vector<1x16xf32>
    %22 = vector.broadcast %20 : vector<16x1xf32> to vector<16x16xf32>
    %23 = vector.broadcast %21 : vector<1x16xf32> to vector<16x16xf32>
    %24 = arith.addf %22, %23 : vector<16x16xf32>
    %cst_16 = arith.constant 0.000000e+00 : f32
    %25 = vector.broadcast %cst_16 : f32 to vector<16x16xf32>
    %26 = arith.cmpf oge, %24, %25 : vector<16x16xf32>
    %cst_17 = arith.constant 2.000000e-01 : f32
    %27 = vector.broadcast %cst_17 : f32 to vector<16x16xf32>
    %28 = arith.mulf %27, %24 : vector<16x16xf32>
    %29 = arith.select %26, %24, %28 : vector<16x16xi1>, vector<16x16xf32>
    %30 = arith.addf %29, %19 : vector<16x16xf32>
    %cst_18 = arith.constant dense<0xFF800000> : vector<16xf32>
    %31 = vector.multi_reduction <maximumf>, %30, %cst_18 [1] : vector<16x16xf32> to vector<16xf32>
    %32 = vector.shape_cast %31 : vector<16xf32> to vector<16x1xf32>
    %33 = vector.broadcast %32 : vector<16x1xf32> to vector<16x16xf32>
    %34 = arith.subf %30, %33 : vector<16x16xf32>
    %35 = math.exp %34 : vector<16x16xf32>
    %cst_19 = arith.constant dense<0.000000e+00> : vector<16xf32>
    %36 = vector.multi_reduction <add>, %35, %cst_19 [1] : vector<16x16xf32> to vector<16xf32>
    %37 = vector.shape_cast %36 : vector<16xf32> to vector<16x1xf32>
    %cst_20 = arith.constant 1.000000e+00 : f32
    %38 = vector.broadcast %cst_20 : f32 to vector<16x1xf32>
    %39 = arith.divf %38, %37 : vector<16x1xf32>
    %40 = vector.extract_strided_slice %6 {offsets = [0, 0], sizes = [16, 2], strides = [1, 1]} : vector<16x16xf32> to vector<16x2xf32>
    %cst_21 = arith.constant dense<0.000000e+00> : vector<16x2xf32>
    %41 = tpu.matmul %35, %40, %cst_21 {dimension_numbers = #tpu.dot_dimension_numbers<[1], [0], [0], [1], [0, 0, 1, 1], [], []>} : vector<16x16xf32>, vector<16x2xf32>, vector<16x2xf32> -> vector<16x2xf32>
    %42 = vector.broadcast %39 : vector<16x1xf32> to vector<16x2xf32>
    %43 = arith.mulf %41, %42 : vector<16x2xf32>
    %44 = vector.extract_strided_slice %14 {offsets = [0, 1], sizes = [16, 1], strides = [1, 1]} : vector<16x8xf32> to vector<16x1xf32>
    %45 = vector.extract_strided_slice %8 {offsets = [1, 0], sizes = [1, 16], strides = [1, 1]} : vector<8x16xf32> to vector<1x16xf32>
    %46 = vector.broadcast %44 : vector<16x1xf32> to vector<16x16xf32>
    %47 = vector.broadcast %45 : vector<1x16xf32> to vector<16x16xf32>
    %48 = arith.addf %46, %47 : vector<16x16xf32>
    %cst_22 = arith.constant 0.000000e+00 : f32
    %49 = vector.broadcast %cst_22 : f32 to vector<16x16xf32>
    %50 = arith.cmpf oge, %48, %49 : vector<16x16xf32>
    %cst_23 = arith.constant 2.000000e-01 : f32
    %51 = vector.broadcast %cst_23 : f32 to vector<16x16xf32>
    %52 = arith.mulf %51, %48 : vector<16x16xf32>
    %53 = arith.select %50, %48, %52 : vector<16x16xi1>, vector<16x16xf32>
    %54 = arith.addf %53, %19 : vector<16x16xf32>
    %cst_24 = arith.constant dense<0xFF800000> : vector<16xf32>
    %55 = vector.multi_reduction <maximumf>, %54, %cst_24 [1] : vector<16x16xf32> to vector<16xf32>
    %56 = vector.shape_cast %55 : vector<16xf32> to vector<16x1xf32>
    %57 = vector.broadcast %56 : vector<16x1xf32> to vector<16x16xf32>
    %58 = arith.subf %54, %57 : vector<16x16xf32>
    %59 = math.exp %58 : vector<16x16xf32>
    %cst_25 = arith.constant dense<0.000000e+00> : vector<16xf32>
    %60 = vector.multi_reduction <add>, %59, %cst_25 [1] : vector<16x16xf32> to vector<16xf32>
    %61 = vector.shape_cast %60 : vector<16xf32> to vector<16x1xf32>
    %cst_26 = arith.constant 1.000000e+00 : f32
    %62 = vector.broadcast %cst_26 : f32 to vector<16x1xf32>
    %63 = arith.divf %62, %61 : vector<16x1xf32>
    %64 = vector.extract_strided_slice %6 {offsets = [0, 2], sizes = [16, 2], strides = [1, 1]} : vector<16x16xf32> to vector<16x2xf32>
    %cst_27 = arith.constant dense<0.000000e+00> : vector<16x2xf32>
    %65 = tpu.matmul %59, %64, %cst_27 {dimension_numbers = #tpu.dot_dimension_numbers<[1], [0], [0], [1], [0, 0, 1, 1], [], []>} : vector<16x16xf32>, vector<16x2xf32>, vector<16x2xf32> -> vector<16x2xf32>
    %66 = vector.broadcast %63 : vector<16x1xf32> to vector<16x2xf32>
    %67 = arith.mulf %65, %66 : vector<16x2xf32>
    %68 = vector.extract_strided_slice %14 {offsets = [0, 2], sizes = [16, 1], strides = [1, 1]} : vector<16x8xf32> to vector<16x1xf32>
    %69 = vector.extract_strided_slice %8 {offsets = [2, 0], sizes = [1, 16], strides = [1, 1]} : vector<8x16xf32> to vector<1x16xf32>
    %70 = vector.broadcast %68 : vector<16x1xf32> to vector<16x16xf32>
    %71 = vector.broadcast %69 : vector<1x16xf32> to vector<16x16xf32>
    %72 = arith.addf %70, %71 : vector<16x16xf32>
    %cst_28 = arith.constant 0.000000e+00 : f32
    %73 = vector.broadcast %cst_28 : f32 to vector<16x16xf32>
    %74 = arith.cmpf oge, %72, %73 : vector<16x16xf32>
    %cst_29 = arith.constant 2.000000e-01 : f32
    %75 = vector.broadcast %cst_29 : f32 to vector<16x16xf32>
    %76 = arith.mulf %75, %72 : vector<16x16xf32>
    %77 = arith.select %74, %72, %76 : vector<16x16xi1>, vector<16x16xf32>
    %78 = arith.addf %77, %19 : vector<16x16xf32>
    %cst_30 = arith.constant dense<0xFF800000> : vector<16xf32>
    %79 = vector.multi_reduction <maximumf>, %78, %cst_30 [1] : vector<16x16xf32> to vector<16xf32>
    %80 = vector.shape_cast %79 : vector<16xf32> to vector<16x1xf32>
    %81 = vector.broadcast %80 : vector<16x1xf32> to vector<16x16xf32>
    %82 = arith.subf %78, %81 : vector<16x16xf32>
    %83 = math.exp %82 : vector<16x16xf32>
    %cst_31 = arith.constant dense<0.000000e+00> : vector<16xf32>
    %84 = vector.multi_reduction <add>, %83, %cst_31 [1] : vector<16x16xf32> to vector<16xf32>
    %85 = vector.shape_cast %84 : vector<16xf32> to vector<16x1xf32>
    %cst_32 = arith.constant 1.000000e+00 : f32
    %86 = vector.broadcast %cst_32 : f32 to vector<16x1xf32>
    %87 = arith.divf %86, %85 : vector<16x1xf32>
    %88 = vector.extract_strided_slice %6 {offsets = [0, 4], sizes = [16, 2], strides = [1, 1]} : vector<16x16xf32> to vector<16x2xf32>
    %cst_33 = arith.constant dense<0.000000e+00> : vector<16x2xf32>
    %89 = tpu.matmul %83, %88, %cst_33 {dimension_numbers = #tpu.dot_dimension_numbers<[1], [0], [0], [1], [0, 0, 1, 1], [], []>} : vector<16x16xf32>, vector<16x2xf32>, vector<16x2xf32> -> vector<16x2xf32>
    %90 = vector.broadcast %87 : vector<16x1xf32> to vector<16x2xf32>
    %91 = arith.mulf %89, %90 : vector<16x2xf32>
    %92 = vector.extract_strided_slice %14 {offsets = [0, 3], sizes = [16, 1], strides = [1, 1]} : vector<16x8xf32> to vector<16x1xf32>
    %93 = vector.extract_strided_slice %8 {offsets = [3, 0], sizes = [1, 16], strides = [1, 1]} : vector<8x16xf32> to vector<1x16xf32>
    %94 = vector.broadcast %92 : vector<16x1xf32> to vector<16x16xf32>
    %95 = vector.broadcast %93 : vector<1x16xf32> to vector<16x16xf32>
    %96 = arith.addf %94, %95 : vector<16x16xf32>
    %cst_34 = arith.constant 0.000000e+00 : f32
    %97 = vector.broadcast %cst_34 : f32 to vector<16x16xf32>
    %98 = arith.cmpf oge, %96, %97 : vector<16x16xf32>
    %cst_35 = arith.constant 2.000000e-01 : f32
    %99 = vector.broadcast %cst_35 : f32 to vector<16x16xf32>
    %100 = arith.mulf %99, %96 : vector<16x16xf32>
    %101 = arith.select %98, %96, %100 : vector<16x16xi1>, vector<16x16xf32>
    %102 = arith.addf %101, %19 : vector<16x16xf32>
    %cst_36 = arith.constant dense<0xFF800000> : vector<16xf32>
    %103 = vector.multi_reduction <maximumf>, %102, %cst_36 [1] : vector<16x16xf32> to vector<16xf32>
    %104 = vector.shape_cast %103 : vector<16xf32> to vector<16x1xf32>
    %105 = vector.broadcast %104 : vector<16x1xf32> to vector<16x16xf32>
    %106 = arith.subf %102, %105 : vector<16x16xf32>
    %107 = math.exp %106 : vector<16x16xf32>
    %cst_37 = arith.constant dense<0.000000e+00> : vector<16xf32>
    %108 = vector.multi_reduction <add>, %107, %cst_37 [1] : vector<16x16xf32> to vector<16xf32>
    %109 = vector.shape_cast %108 : vector<16xf32> to vector<16x1xf32>
    %cst_38 = arith.constant 1.000000e+00 : f32
    %110 = vector.broadcast %cst_38 : f32 to vector<16x1xf32>
    %111 = arith.divf %110, %109 : vector<16x1xf32>
    %112 = vector.extract_strided_slice %6 {offsets = [0, 6], sizes = [16, 2], strides = [1, 1]} : vector<16x16xf32> to vector<16x2xf32>
    %cst_39 = arith.constant dense<0.000000e+00> : vector<16x2xf32>
    %113 = tpu.matmul %107, %112, %cst_39 {dimension_numbers = #tpu.dot_dimension_numbers<[1], [0], [0], [1], [0, 0, 1, 1], [], []>} : vector<16x16xf32>, vector<16x2xf32>, vector<16x2xf32> -> vector<16x2xf32>
    %114 = vector.broadcast %111 : vector<16x1xf32> to vector<16x2xf32>
    %115 = arith.mulf %113, %114 : vector<16x2xf32>
    %116 = vector.extract_strided_slice %14 {offsets = [0, 4], sizes = [16, 1], strides = [1, 1]} : vector<16x8xf32> to vector<16x1xf32>
    %117 = vector.extract_strided_slice %8 {offsets = [4, 0], sizes = [1, 16], strides = [1, 1]} : vector<8x16xf32> to vector<1x16xf32>
    %118 = vector.broadcast %116 : vector<16x1xf32> to vector<16x16xf32>
    %119 = vector.broadcast %117 : vector<1x16xf32> to vector<16x16xf32>
    %120 = arith.addf %118, %119 : vector<16x16xf32>
    %cst_40 = arith.constant 0.000000e+00 : f32
    %121 = vector.broadcast %cst_40 : f32 to vector<16x16xf32>
    %122 = arith.cmpf oge, %120, %121 : vector<16x16xf32>
    %cst_41 = arith.constant 2.000000e-01 : f32
    %123 = vector.broadcast %cst_41 : f32 to vector<16x16xf32>
    %124 = arith.mulf %123, %120 : vector<16x16xf32>
    %125 = arith.select %122, %120, %124 : vector<16x16xi1>, vector<16x16xf32>
    %126 = arith.addf %125, %19 : vector<16x16xf32>
    %cst_42 = arith.constant dense<0xFF800000> : vector<16xf32>
    %127 = vector.multi_reduction <maximumf>, %126, %cst_42 [1] : vector<16x16xf32> to vector<16xf32>
    %128 = vector.shape_cast %127 : vector<16xf32> to vector<16x1xf32>
    %129 = vector.broadcast %128 : vector<16x1xf32> to vector<16x16xf32>
    %130 = arith.subf %126, %129 : vector<16x16xf32>
    %131 = math.exp %130 : vector<16x16xf32>
    %cst_43 = arith.constant dense<0.000000e+00> : vector<16xf32>
    %132 = vector.multi_reduction <add>, %131, %cst_43 [1] : vector<16x16xf32> to vector<16xf32>
    %133 = vector.shape_cast %132 : vector<16xf32> to vector<16x1xf32>
    %cst_44 = arith.constant 1.000000e+00 : f32
    %134 = vector.broadcast %cst_44 : f32 to vector<16x1xf32>
    %135 = arith.divf %134, %133 : vector<16x1xf32>
    %136 = vector.extract_strided_slice %6 {offsets = [0, 8], sizes = [16, 2], strides = [1, 1]} : vector<16x16xf32> to vector<16x2xf32>
    %cst_45 = arith.constant dense<0.000000e+00> : vector<16x2xf32>
    %137 = tpu.matmul %131, %136, %cst_45 {dimension_numbers = #tpu.dot_dimension_numbers<[1], [0], [0], [1], [0, 0, 1, 1], [], []>} : vector<16x16xf32>, vector<16x2xf32>, vector<16x2xf32> -> vector<16x2xf32>
    %138 = vector.broadcast %135 : vector<16x1xf32> to vector<16x2xf32>
    %139 = arith.mulf %137, %138 : vector<16x2xf32>
    %140 = vector.extract_strided_slice %14 {offsets = [0, 5], sizes = [16, 1], strides = [1, 1]} : vector<16x8xf32> to vector<16x1xf32>
    %141 = vector.extract_strided_slice %8 {offsets = [5, 0], sizes = [1, 16], strides = [1, 1]} : vector<8x16xf32> to vector<1x16xf32>
    %142 = vector.broadcast %140 : vector<16x1xf32> to vector<16x16xf32>
    %143 = vector.broadcast %141 : vector<1x16xf32> to vector<16x16xf32>
    %144 = arith.addf %142, %143 : vector<16x16xf32>
    %cst_46 = arith.constant 0.000000e+00 : f32
    %145 = vector.broadcast %cst_46 : f32 to vector<16x16xf32>
    %146 = arith.cmpf oge, %144, %145 : vector<16x16xf32>
    %cst_47 = arith.constant 2.000000e-01 : f32
    %147 = vector.broadcast %cst_47 : f32 to vector<16x16xf32>
    %148 = arith.mulf %147, %144 : vector<16x16xf32>
    %149 = arith.select %146, %144, %148 : vector<16x16xi1>, vector<16x16xf32>
    %150 = arith.addf %149, %19 : vector<16x16xf32>
    %cst_48 = arith.constant dense<0xFF800000> : vector<16xf32>
    %151 = vector.multi_reduction <maximumf>, %150, %cst_48 [1] : vector<16x16xf32> to vector<16xf32>
    %152 = vector.shape_cast %151 : vector<16xf32> to vector<16x1xf32>
    %153 = vector.broadcast %152 : vector<16x1xf32> to vector<16x16xf32>
    %154 = arith.subf %150, %153 : vector<16x16xf32>
    %155 = math.exp %154 : vector<16x16xf32>
    %cst_49 = arith.constant dense<0.000000e+00> : vector<16xf32>
    %156 = vector.multi_reduction <add>, %155, %cst_49 [1] : vector<16x16xf32> to vector<16xf32>
    %157 = vector.shape_cast %156 : vector<16xf32> to vector<16x1xf32>
    %cst_50 = arith.constant 1.000000e+00 : f32
    %158 = vector.broadcast %cst_50 : f32 to vector<16x1xf32>
    %159 = arith.divf %158, %157 : vector<16x1xf32>
    %160 = vector.extract_strided_slice %6 {offsets = [0, 10], sizes = [16, 2], strides = [1, 1]} : vector<16x16xf32> to vector<16x2xf32>
    %cst_51 = arith.constant dense<0.000000e+00> : vector<16x2xf32>
    %161 = tpu.matmul %155, %160, %cst_51 {dimension_numbers = #tpu.dot_dimension_numbers<[1], [0], [0], [1], [0, 0, 1, 1], [], []>} : vector<16x16xf32>, vector<16x2xf32>, vector<16x2xf32> -> vector<16x2xf32>
    %162 = vector.broadcast %159 : vector<16x1xf32> to vector<16x2xf32>
    %163 = arith.mulf %161, %162 : vector<16x2xf32>
    %164 = vector.extract_strided_slice %14 {offsets = [0, 6], sizes = [16, 1], strides = [1, 1]} : vector<16x8xf32> to vector<16x1xf32>
    %165 = vector.extract_strided_slice %8 {offsets = [6, 0], sizes = [1, 16], strides = [1, 1]} : vector<8x16xf32> to vector<1x16xf32>
    %166 = vector.broadcast %164 : vector<16x1xf32> to vector<16x16xf32>
    %167 = vector.broadcast %165 : vector<1x16xf32> to vector<16x16xf32>
    %168 = arith.addf %166, %167 : vector<16x16xf32>
    %cst_52 = arith.constant 0.000000e+00 : f32
    %169 = vector.broadcast %cst_52 : f32 to vector<16x16xf32>
    %170 = arith.cmpf oge, %168, %169 : vector<16x16xf32>
    %cst_53 = arith.constant 2.000000e-01 : f32
    %171 = vector.broadcast %cst_53 : f32 to vector<16x16xf32>
    %172 = arith.mulf %171, %168 : vector<16x16xf32>
    %173 = arith.select %170, %168, %172 : vector<16x16xi1>, vector<16x16xf32>
    %174 = arith.addf %173, %19 : vector<16x16xf32>
    %cst_54 = arith.constant dense<0xFF800000> : vector<16xf32>
    %175 = vector.multi_reduction <maximumf>, %174, %cst_54 [1] : vector<16x16xf32> to vector<16xf32>
    %176 = vector.shape_cast %175 : vector<16xf32> to vector<16x1xf32>
    %177 = vector.broadcast %176 : vector<16x1xf32> to vector<16x16xf32>
    %178 = arith.subf %174, %177 : vector<16x16xf32>
    %179 = math.exp %178 : vector<16x16xf32>
    %cst_55 = arith.constant dense<0.000000e+00> : vector<16xf32>
    %180 = vector.multi_reduction <add>, %179, %cst_55 [1] : vector<16x16xf32> to vector<16xf32>
    %181 = vector.shape_cast %180 : vector<16xf32> to vector<16x1xf32>
    %cst_56 = arith.constant 1.000000e+00 : f32
    %182 = vector.broadcast %cst_56 : f32 to vector<16x1xf32>
    %183 = arith.divf %182, %181 : vector<16x1xf32>
    %184 = vector.extract_strided_slice %6 {offsets = [0, 12], sizes = [16, 2], strides = [1, 1]} : vector<16x16xf32> to vector<16x2xf32>
    %cst_57 = arith.constant dense<0.000000e+00> : vector<16x2xf32>
    %185 = tpu.matmul %179, %184, %cst_57 {dimension_numbers = #tpu.dot_dimension_numbers<[1], [0], [0], [1], [0, 0, 1, 1], [], []>} : vector<16x16xf32>, vector<16x2xf32>, vector<16x2xf32> -> vector<16x2xf32>
    %186 = vector.broadcast %183 : vector<16x1xf32> to vector<16x2xf32>
    %187 = arith.mulf %185, %186 : vector<16x2xf32>
    %188 = vector.extract_strided_slice %14 {offsets = [0, 7], sizes = [16, 1], strides = [1, 1]} : vector<16x8xf32> to vector<16x1xf32>
    %189 = vector.extract_strided_slice %8 {offsets = [7, 0], sizes = [1, 16], strides = [1, 1]} : vector<8x16xf32> to vector<1x16xf32>
    %190 = vector.broadcast %188 : vector<16x1xf32> to vector<16x16xf32>
    %191 = vector.broadcast %189 : vector<1x16xf32> to vector<16x16xf32>
    %192 = arith.addf %190, %191 : vector<16x16xf32>
    %cst_58 = arith.constant 0.000000e+00 : f32
    %193 = vector.broadcast %cst_58 : f32 to vector<16x16xf32>
    %194 = arith.cmpf oge, %192, %193 : vector<16x16xf32>
    %cst_59 = arith.constant 2.000000e-01 : f32
    %195 = vector.broadcast %cst_59 : f32 to vector<16x16xf32>
    %196 = arith.mulf %195, %192 : vector<16x16xf32>
    %197 = arith.select %194, %192, %196 : vector<16x16xi1>, vector<16x16xf32>
    %198 = arith.addf %197, %19 : vector<16x16xf32>
    %cst_60 = arith.constant dense<0xFF800000> : vector<16xf32>
    %199 = vector.multi_reduction <maximumf>, %198, %cst_60 [1] : vector<16x16xf32> to vector<16xf32>
    %200 = vector.shape_cast %199 : vector<16xf32> to vector<16x1xf32>
    %201 = vector.broadcast %200 : vector<16x1xf32> to vector<16x16xf32>
    %202 = arith.subf %198, %201 : vector<16x16xf32>
    %203 = math.exp %202 : vector<16x16xf32>
    %cst_61 = arith.constant dense<0.000000e+00> : vector<16xf32>
    %204 = vector.multi_reduction <add>, %203, %cst_61 [1] : vector<16x16xf32> to vector<16xf32>
    %205 = vector.shape_cast %204 : vector<16xf32> to vector<16x1xf32>
    %cst_62 = arith.constant 1.000000e+00 : f32
    %206 = vector.broadcast %cst_62 : f32 to vector<16x1xf32>
    %207 = arith.divf %206, %205 : vector<16x1xf32>
    %208 = vector.extract_strided_slice %6 {offsets = [0, 14], sizes = [16, 2], strides = [1, 1]} : vector<16x16xf32> to vector<16x2xf32>
    %cst_63 = arith.constant dense<0.000000e+00> : vector<16x2xf32>
    %209 = tpu.matmul %203, %208, %cst_63 {dimension_numbers = #tpu.dot_dimension_numbers<[1], [0], [0], [1], [0, 0, 1, 1], [], []>} : vector<16x16xf32>, vector<16x2xf32>, vector<16x2xf32> -> vector<16x2xf32>
    %210 = vector.broadcast %207 : vector<16x1xf32> to vector<16x2xf32>
    %211 = arith.mulf %209, %210 : vector<16x2xf32>
    %212 = tpu.concatenate %43, %67, %91, %115, %139, %163, %187, %211 in 1 : vector<16x2xf32>, vector<16x2xf32>, vector<16x2xf32>, vector<16x2xf32>, vector<16x2xf32>, vector<16x2xf32>, vector<16x2xf32>, vector<16x2xf32> -> vector<16x16xf32>
    %cst_64 = arith.constant 0.000000e+00 : f32
    %213 = vector.broadcast %cst_64 : f32 to vector<16x16xf32>
    %214 = arith.maximumf %212, %213 : vector<16x16xf32>
    %c0_65 = arith.constant 0 : index
    %c0_66 = arith.constant 0 : index
    %215 = vector.load %arg8[%c0_65, %c0_66] : memref<16x16xf32, #tpu.memory_space<vmem>>, vector<16x16xf32>
    tpu.vector_store %arg8[%c0_65, %c0_66], %214 {strides = array<i32>} : memref<16x16xf32, #tpu.memory_space<vmem>>, vector<16x16xf32>,
    return
  }
  func.func @transform_0(%arg0: i32) -> (i32, i32) {
    %c0_i32 = arith.constant 0 : i32
    %c0_i32_0 = arith.constant 0 : i32
    %c0_i32_1 = arith.constant 0 : i32
    return %c0_i32, %c0_i32_0 : i32, i32
  }
  func.func @transform_1(%arg0: i32) -> (i32, i32) {
    %c0_i32 = arith.constant 0 : i32
    %c0_i32_0 = arith.constant 0 : i32
    return %arg0, %c0_i32 : i32, i32
  }
  func.func @transform_2(%arg0: i32) -> (i32, i32) {
    %c0_i32 = arith.constant 0 : i32
    %c0_i32_0 = arith.constant 0 : i32
    %c0_i32_1 = arith.constant 0 : i32
    return %c0_i32, %c0_i32_0 : i32, i32
  }
  func.func @transform_3(%arg0: i32) -> (i32, i32) {
    %c0_i32 = arith.constant 0 : i32
    %c0_i32_0 = arith.constant 0 : i32
    %c0_i32_1 = arith.constant 0 : i32
    return %c0_i32, %c0_i32_0 : i32, i32
  }
  func.func @transform_4(%arg0: i32) -> (i32, i32) {
    %c0_i32 = arith.constant 0 : i32
    %c0_i32_0 = arith.constant 0 : i32
    %c0_i32_1 = arith.constant 0 : i32
    return %c0_i32, %c0_i32_0 : i32, i32
  }
  func.func @transform_5(%arg0: i32) -> (i32, i32) {
    %c0_i32 = arith.constant 0 : i32
    %c0_i32_0 = arith.constant 0 : i32
    %c0_i32_1 = arith.constant 0 : i32
    return %c0_i32, %c0_i32_0 : i32, i32
  }
  func.func @transform_6(%arg0: i32) -> (i32, i32) {
    %c0_i32 = arith.constant 0 : i32
    %c0_i32_0 = arith.constant 0 : i32
    return %arg0, %c0_i32 : i32, i32
  }
  func.func @transform_7(%arg0: i32) -> (i32, i32) {
    %c0_i32 = arith.constant 0 : i32
    %c0_i32_0 = arith.constant 0 : i32
    return %arg0, %c0_i32 : i32, i32
  }
}

</mosaic_0001>

<llo_original>
// kernel: tpu_custom_call.1
$region0: #{tpu_custom_call.1}
  #allocation0 [shape = 'u32[]', space=smem, size = 0x4, offset = 0x4, fixed_abs, tag = 'smem constant byte address 0x4 - core index']
  #allocation1 [shape = 'u32[144,128]{1,0:T(1,128)}', space=vmem, size = 0x12000, scoped, tag = 'internal scratch']
  %s0 = inlined_call_operand.hbm [shape: f32[16,12], index: 0, kind: input, shape index: {}]
  %s1 = inlined_call_operand.hbm [shape: f32[16,8], index: 1, kind: input, shape index: {}]
  %s2 = inlined_call_operand.hbm [shape: f32[12,24], index: 2, kind: input, shape index: {}]
  %s3 = inlined_call_operand.hbm [shape: f32[1,24], index: 3, kind: input, shape index: {}]
  %s4 = inlined_call_operand.hbm [shape: f32[8,8], index: 4, kind: input, shape index: {}]
  %s5 = inlined_call_operand.hbm [shape: f32[1,8], index: 5, kind: input, shape index: {}]
  %s6 = inlined_call_operand.hbm [shape: f32[16,16], index: 6, kind: input, shape index: {}]
  %s7 = inlined_call_operand.hbm [shape: f32[16,16], index: 7, kind: output, shape index: {}]
  %s8 = sld [smem:[#allocation0]]
  $region66: #{tpu_custom_call.1} parent=0
    _
  %s10 = ssub.s32 1, %s8
  %s11 = scalar_select 0, %s10, %s8
  $region1: #{tpu_custom_call.1} parent=0
    #allocation2 [shape = 'u8[8192]{0}', space=vmem, size = 0x2000, scoped, tag = 'input window, operand 0, single buffered']
    #allocation3 [shape = 's32[1]{0}', space=sflag, size = 0x4, scoped, tag = 'scoped memory for tpu_custom_call.1']
    #allocation4 [shape = 's32[1]{0}', space=sflag, size = 0x4, scoped, tag = 'scoped memory for tpu_custom_call.1']
    #allocation5 [shape = 'u8[8192]{0}', space=vmem, size = 0x2000, scoped, tag = 'input window, operand 1, single buffered']
    #allocation6 [shape = 's32[1]{0}', space=sflag, size = 0x4, scoped, tag = 'scoped memory for tpu_custom_call.1']
    #allocation7 [shape = 'u8[8192]{0}', space=vmem, size = 0x2000, scoped, tag = 'input window, operand 2, single buffered']
    #allocation8 [shape = 'u8[512]{0}', space=vmem, size = 0x400, scoped, tag = 'input window, operand 3, single buffered']
    #allocation9 [shape = 's32[1]{0}', space=sflag, size = 0x4, scoped, tag = 'scoped memory for tpu_custom_call.1']
    #allocation10 [shape = 'u8[4096]{0}', space=vmem, size = 0x1000, scoped, tag = 'input window, operand 4, single buffered']
    #allocation11 [shape = 'u8[512]{0}', space=vmem, size = 0x400, scoped, tag = 'input window, operand 5, single buffered']
    #allocation12 [shape = 's32[1]{0}', space=sflag, size = 0x4, scoped, tag = 'scoped memory for tpu_custom_call.1']
    #allocation13 [shape = 'u8[8192]{0}', space=vmem, size = 0x2000, scoped, tag = 'input window, operand 6, single buffered']
    #allocation14 [shape = 'u8[8192]{0}', space=vmem, size = 0x2000, scoped, tag = 'output window, operand 0, single buffered']
    %12 = vsyncpa [#allocation3], 0
    %13 = vsyncpa [#allocation6], 0
    %14 = vsyncpa [#allocation9], 0
    %15 = vsyncpa [#allocation12], 0
    %16 = vsyncpa [#allocation4], 0
    // Predicated region
    $region2: #{tpu_custom_call.1} parent=1 // pred_check
      _
    $region3: #{tpu_custom_call.1} parent=1 // pred_check_branch
      %18 = sbr.rel (0) target = $region5
    $region4: #{tpu_custom_call.1} parent=1 // pred_region
      %s20 = ssub.s32 256, 256
      %21 = vsyncadd [#allocation3], %s20
      %s22 = sshll.u32 [#allocation2], 4
      %s23 = int_to_ptr.vmem [resolvable:$true] %s22
      %28 = dma.hbm_to_vmem [thread:$0]  %s0, 256, %s23, [#allocation3], 128, 128, 8
    $region5: #{tpu_custom_call.1} parent=1 // pred_fallthru
      _
    // Predicated region
    $region6: #{tpu_custom_call.1} parent=1 // pred_check
      _
    $region7: #{tpu_custom_call.1} parent=1 // pred_check_branch
      %30 = sbr.rel (0) target = $region9
    $region8: #{tpu_custom_call.1} parent=1 // pred_region
      %s32 = ssub.s32 256, 256
      %33 = vsyncadd [#allocation6], %s32
      %s34 = sshll.u32 [#allocation5], 4
      %s35 = int_to_ptr.vmem [resolvable:$true] %s34
      %40 = dma.hbm_to_vmem [thread:$0]  %s1, 256, %s35, [#allocation6], 128, 128, 8
    $region9: #{tpu_custom_call.1} parent=1 // pred_fallthru
      _
    // Predicated region
    $region10: #{tpu_custom_call.1} parent=1 // pred_check
      _
    $region11: #{tpu_custom_call.1} parent=1 // pred_check_branch
      %42 = sbr.rel (0) target = $region13
    $region12: #{tpu_custom_call.1} parent=1 // pred_region
      %s44 = ssub.s32 256, 256
      %45 = vsyncadd [#allocation6], %s44
      %s46 = sshll.u32 [#allocation7], 4
      %s47 = int_to_ptr.vmem [resolvable:$true] %s46
      %52 = dma.hbm_to_vmem [thread:$0]  %s2, 256, %s47, [#allocation6], 128, 128, 8
    $region13: #{tpu_custom_call.1} parent=1 // pred_fallthru
      _
    // Predicated region
    $region14: #{tpu_custom_call.1} parent=1 // pred_check
      _
    $region15: #{tpu_custom_call.1} parent=1 // pred_check_branch
      %54 = sbr.rel (0) target = $region17
    $region16: #{tpu_custom_call.1} parent=1 // pred_region
      %s56 = ssub.s32 16, 16
      %57 = vsyncadd [#allocation9], %s56
      %s59 = sshll.u32 [#allocation8], 4
      %s60 = int_to_ptr.vmem [resolvable:$true] %s59
      %62 = dma.hbm_to_vmem [thread:$0]  %s3, 16, %s60, [#allocation9]
    $region17: #{tpu_custom_call.1} parent=1 // pred_fallthru
      _
    // Predicated region
    $region18: #{tpu_custom_call.1} parent=1 // pred_check
      _
    $region19: #{tpu_custom_call.1} parent=1 // pred_check_branch
      %64 = sbr.rel (0) target = $region21
    $region20: #{tpu_custom_call.1} parent=1 // pred_region
      %s66 = ssub.s32 128, 128
      %67 = vsyncadd [#allocation9], %s66
      %s69 = sshll.u32 [#allocation10], 4
      %s70 = int_to_ptr.vmem [resolvable:$true] %s69
      %72 = dma.hbm_to_vmem [thread:$0]  %s4, 128, %s70, [#allocation9]
    $region21: #{tpu_custom_call.1} parent=1 // pred_fallthru
      _
    // Predicated region
    $region22: #{tpu_custom_call.1} parent=1 // pred_check
      _
    $region23: #{tpu_custom_call.1} parent=1 // pred_check_branch
      %74 = sbr.rel (0) target = $region25
    $region24: #{tpu_custom_call.1} parent=1 // pred_region
      %s76 = ssub.s32 16, 16
      %77 = vsyncadd [#allocation12], %s76
      %s79 = sshll.u32 [#allocation11], 4
      %s80 = int_to_ptr.vmem [resolvable:$true] %s79
      %82 = dma.hbm_to_vmem [thread:$0]  %s5, 16, %s80, [#allocation12]
    $region25: #{tpu_custom_call.1} parent=1 // pred_fallthru
      _
    // Predicated region
    $region26: #{tpu_custom_call.1} parent=1 // pred_check
      _
    $region27: #{tpu_custom_call.1} parent=1 // pred_check_branch
      %84 = sbr.rel (0) target = $region29
    $region28: #{tpu_custom_call.1} parent=1 // pred_region
      %s86 = ssub.s32 256, 256
      %87 = vsyncadd [#allocation12], %s86
      %s88 = sshll.u32 [#allocation13], 4
      %s89 = int_to_ptr.vmem [resolvable:$true] %s88
      %94 = dma.hbm_to_vmem [thread:$0]  %s6, 256, %s89, [#allocation12], 128, 128, 8
    $region29: #{tpu_custom_call.1} parent=1 // pred_fallthru
      _
    // Predicated region
    $region30: #{tpu_custom_call.1} parent=1 // pred_check
      _
    $region31: #{tpu_custom_call.1} parent=1 // pred_check_branch
      %96 = sbr.rel (0) target = $region33
    $region32: #{tpu_custom_call.1} parent=1 // pred_region
      %97 = dma.done [#allocation3], 256
    $region33: #{tpu_custom_call.1} parent=1 // pred_fallthru
      _
    // Predicated region
    $region34: #{tpu_custom_call.1} parent=1 // pred_check
      _
    $region35: #{tpu_custom_call.1} parent=1 // pred_check_branch
      %99 = sbr.rel (0) target = $region37
    $region36: #{tpu_custom_call.1} parent=1 // pred_region
      %100 = dma.done [#allocation6], 256
    $region37: #{tpu_custom_call.1} parent=1 // pred_fallthru
      _
    // Predicated region
    $region38: #{tpu_custom_call.1} parent=1 // pred_check
      _
    $region39: #{tpu_custom_call.1} parent=1 // pred_check_branch
      %102 = sbr.rel (0) target = $region41
    $region40: #{tpu_custom_call.1} parent=1 // pred_region
      %103 = dma.done [#allocation6], 256
    $region41: #{tpu_custom_call.1} parent=1 // pred_fallthru
      _
    // Predicated region
    $region42: #{tpu_custom_call.1} parent=1 // pred_check
      _
    $region43: #{tpu_custom_call.1} parent=1 // pred_check_branch
      %105 = sbr.rel (0) target = $region45
    $region44: #{tpu_custom_call.1} parent=1 // pred_region
      %106 = dma.done [#allocation9], 16
    $region45: #{tpu_custom_call.1} parent=1 // pred_fallthru
      _
    // Predicated region
    $region46: #{tpu_custom_call.1} parent=1 // pred_check
      _
    $region47: #{tpu_custom_call.1} parent=1 // pred_check_branch
      %108 = sbr.rel (0) target = $region49
    $region48: #{tpu_custom_call.1} parent=1 // pred_region
      %109 = dma.done [#allocation9], 128
    $region49: #{tpu_custom_call.1} parent=1 // pred_fallthru
      _
    // Predicated region
    $region50: #{tpu_custom_call.1} parent=1 // pred_check
      _
    $region51: #{tpu_custom_call.1} parent=1 // pred_check_branch
      %111 = sbr.rel (0) target = $region53
    $region52: #{tpu_custom_call.1} parent=1 // pred_region
      %112 = dma.done [#allocation12], 16
    $region53: #{tpu_custom_call.1} parent=1 // pred_fallthru
      _
    // Predicated region
    $region54: #{tpu_custom_call.1} parent=1 // pred_check
      _
    $region55: #{tpu_custom_call.1} parent=1 // pred_check_branch
      %114 = sbr.rel (0) target = $region57
    $region56: #{tpu_custom_call.1} parent=1 // pred_region
      %115 = dma.done [#allocation12], 256
    $region57: #{tpu_custom_call.1} parent=1 // pred_fallthru
      _
    %v116 = vld [vmem:[#allocation2] sm:$0xff]
    %v117 = vld [vmem:[#allocation2 + $0x8] sm:$0xff]
    %v118 = vld [vmem:[#allocation7] sm:$0xff]
    %v119 = vld [vmem:[#allocation7 + $0x8] sm:$0xf]
    %v120 = vld [vmem:[#allocation8] sm:$0x1]
    %v122 = vlaneseq
    %v123 = vshrl.u32 %v122, 7
    %v124 = vsub.s32 0, %v123
    %v125 = vrot.slane %v120, %v124
    %vm127 = vcmask 97280
    %v129 = vsel %vm127, %v116, 0
    %v132 = vsel %vm127, %v117, 0
    %vm134 = vcmask 1043456
    %v136 = vsel %vm134, %v119, 0
    %138 = vmatprep.subr.mxu0 0.0
    %139 = vmatpush1.msra.mxu0 %v118
    %140 = vmatprep.subr.mxu0 0.0
    %141 = vmatpush1.msra.mxu0 %v136
    %142 = vmatprep.subr.mxu0 0.0
    %143 = vmatpush1.msra.mxu0 0.0
    %144 = vmatprep.subr.mxu0 0.0
    %145 = vmatpush1.msra.mxu0 0.0
    %146 = vmatprep.subr.mxu0 0.0
    %147 = vmatpush1.msra.mxu0 0.0
    %148 = vmatprep.subr.mxu0 0.0
    %149 = vmatpush1.msra.mxu0 0.0
    %150 = vmatprep.subr.mxu0 0.0
    %151 = vmatpush1.msra.mxu0 0.0
    %152 = vmatprep.subr.mxu0 0.0
    %153 = vmatpush1.msra.mxu0 0.0
    %154 = vmatprep.subr.mxu0 0.0
    %155 = vmatpush1.msra.mxu0 0.0
    %156 = vmatprep.subr.mxu0 0.0
    %157 = vmatpush1.msra.mxu0 0.0
    %158 = vmatprep.subr.mxu0 0.0
    %159 = vmatpush1.msra.mxu0 0.0
    %160 = vmatprep.subr.mxu0 0.0
    %161 = vmatpush1.msra.mxu0 0.0
    %162 = vmatprep.subr.mxu0 0.0
    %163 = vmatpush1.msra.mxu0 0.0
    %164 = vmatprep.subr.mxu0 0.0
    %165 = vmatpush1.msra.mxu0 0.0
    %166 = vmatprep.subr.mxu0 0.0
    %167 = vmatpush1.msra.mxu0 0.0
    %168 = vmatprep.subr.mxu0 0.0
    %169 = vmatpush1.msra.mxu0 0.0
    %170 = vmatprep.subr.mxu0 0.0
    %171 = vmatpush1.msra.mxu0 0.0
    %172 = vmatprep.subr.mxu0 0.0
    %173 = vmatpush1.msra.mxu0 0.0
    %174 = vmatprep.subr.mxu0 0.0
    %175 = vmatpush1.msra.mxu0 0.0
    %176 = vmatprep.subr.mxu0 0.0
    %177 = vmatpush1.msra.mxu0 0.0
    %178 = vmatprep.subr.mxu0 0.0
    %179 = vmatpush1.msra.mxu0 0.0
    %180 = vmatprep.subr.mxu0 0.0
    %181 = vmatpush1.msra.mxu0 0.0
    %182 = vmatprep.subr.mxu0 0.0
    %183 = vmatpush1.msra.mxu0 0.0
    %184 = vmatprep.subr.mxu0 0.0
    %185 = vmatpush1.msra.mxu0 0.0
    %186 = vmatprep.subr.mxu0 0.0
    %187 = vmatpush1.msra.mxu0 0.0
    %188 = vmatprep.subr.mxu0 0.0
    %189 = vmatpush1.msra.mxu0 0.0
    %190 = vmatprep.subr.mxu0 0.0
    %191 = vmatpush1.msra.mxu0 0.0
    %192 = vmatprep.subr.mxu0 0.0
    %193 = vmatpush1.msra.mxu0 0.0
    %194 = vmatprep.subr.mxu0 0.0
    %195 = vmatpush1.msra.mxu0 0.0
    %196 = vmatprep.subr.mxu0 0.0
    %197 = vmatpush1.msra.mxu0 0.0
    %198 = vmatprep.subr.mxu0 0.0
    %199 = vmatpush1.msra.mxu0 0.0
    %200 = vmatprep.subr.mxu0 0.0
    %201 = vmatpush1.msra.mxu0 0.0
    %202 = vmatprep.mubr.f32.mxu0 0.0
    %203 = vmatmul.mubr.f32.gmra.mrb[0].mxu0 %v129
    %v204 = vpop.f32.mrb[0].mxu0
    %v205 = vadd.f32 %v125, %v204
    %v206 = vpop.f32.mrb[0].mxu0
    %207 = vmatprep.mubr.f32.mxu0 0.0
    %208 = vmatmul.mubr.f32.gmra.mrb[0].mxu0 %v132
    %v209 = vpop.f32.mrb[0].mxu0
    %v210 = vadd.f32 %v125, %v209
    %v211 = vpop.f32.mrb[0].mxu0
    %212 = vdwg.mxu0
    %215 = vrot.lane.b32.xlu0 %v205, 112
    %v216 = vpop.permute.xlu0 %215
    %217 = vrot.lane.b32.xlu0 %v210, 112
    %v218 = vpop.permute.xlu0 %217
    %221 = vxpose.xlu0.b32.start [1/16] %v216, 128
    %222 = vxpose.xlu0.b32.cont [2/16] %v218, 128
    %223 = vxpose.xlu0.b32.cont [3/16] 0.0, 128
    %224 = vxpose.xlu0.b32.cont [4/16] 0.0, 128
    %225 = vxpose.xlu0.b32.cont [5/16] 0.0, 128
    %226 = vxpose.xlu0.b32.cont [6/16] 0.0, 128
    %227 = vxpose.xlu0.b32.cont [7/16] 0.0, 128
    %228 = vxpose.xlu0.b32.cont [8/16] 0.0, 128
    %229 = vxpose.xlu0.b32.cont [9/16] 0.0, 128
    %230 = vxpose.xlu0.b32.cont [10/16] 0.0, 128
    %231 = vxpose.xlu0.b32.cont [11/16] 0.0, 128
    %232 = vxpose.xlu0.b32.cont [12/16] 0.0, 128
    %233 = vxpose.xlu0.b32.cont [13/16] 0.0, 128
    %234 = vxpose.xlu0.b32.cont [14/16] 0.0, 128
    %235 = vxpose.xlu0.b32.cont [15/16] 0.0, 128
    %236 = vxpose.xlu0.b32.end [16/16] 0.0, 128
    %v237 = vpop.trf.xlu0
    %v238 = vpop.trf.xlu0
    %v239 = vpop.trf.xlu0
    %v240 = vpop.trf.xlu0
    %v241 = vpop.trf.xlu0
    %v242 = vpop.trf.xlu0
    %v243 = vpop.trf.xlu0
    %v244 = vpop.trf.xlu0
    %v245 = vpop.trf.xlu0
    %v246 = vpop.trf.xlu0
    %v247 = vpop.trf.xlu0
    %v248 = vpop.trf.xlu0
    %v249 = vpop.trf.xlu0
    %v250 = vpop.trf.xlu0
    %v251 = vpop.trf.xlu0
    %v252 = vpop.trf.xlu0
    %v253 = vld [vmem:[#allocation5] sm:$0xff]
    %v254 = vld [vmem:[#allocation5 + $0x8] sm:$0xff]
    %v255 = vld [vmem:[#allocation10] sm:$0xff]
    %v256 = vld [vmem:[#allocation11] sm:$0x1]
    %v258 = vlaneseq
    %v259 = vshrl.u32 %v258, 7
    %v260 = vsub.s32 0, %v259
    %v261 = vrot.slane %v256, %v260
    %vm263 = vcmask 64512
    %v265 = vsel %vm263, %v253, 0
    %v268 = vsel %vm263, %v254, 0
    %270 = vmatprep.subr.mxu0 0.0
    %271 = vmatpush1.msra.mxu0 %v255
    %272 = vmatprep.subr.mxu0 0.0
    %273 = vmatpush1.msra.mxu0 0.0
    %274 = vmatprep.subr.mxu0 0.0
    %275 = vmatpush1.msra.mxu0 0.0
    %276 = vmatprep.subr.mxu0 0.0
    %277 = vmatpush1.msra.mxu0 0.0
    %278 = vmatprep.subr.mxu0 0.0
    %279 = vmatpush1.msra.mxu0 0.0
    %280 = vmatprep.subr.mxu0 0.0
    %281 = vmatpush1.msra.mxu0 0.0
    %282 = vmatprep.subr.mxu0 0.0
    %283 = vmatpush1.msra.mxu0 0.0
    %284 = vmatprep.subr.mxu0 0.0
    %285 = vmatpush1.msra.mxu0 0.0
    %286 = vmatprep.subr.mxu0 0.0
    %287 = vmatpush1.msra.mxu0 0.0
    %288 = vmatprep.subr.mxu0 0.0
    %289 = vmatpush1.msra.mxu0 0.0
    %290 = vmatprep.subr.mxu0 0.0
    %291 = vmatpush1.msra.mxu0 0.0
    %292 = vmatprep.subr.mxu0 0.0
    %293 = vmatpush1.msra.mxu0 0.0
    %294 = vmatprep.subr.mxu0 0.0
    %295 = vmatpush1.msra.mxu0 0.0
    %296 = vmatprep.subr.mxu0 0.0
    %297 = vmatpush1.msra.mxu0 0.0
    %298 = vmatprep.subr.mxu0 0.0
    %299 = vmatpush1.msra.mxu0 0.0
    %300 = vmatprep.subr.mxu0 0.0
    %301 = vmatpush1.msra.mxu0 0.0
    %302 = vmatprep.subr.mxu0 0.0
    %303 = vmatpush1.msra.mxu0 0.0
    %304 = vmatprep.subr.mxu0 0.0
    %305 = vmatpush1.msra.mxu0 0.0
    %306 = vmatprep.subr.mxu0 0.0
    %307 = vmatpush1.msra.mxu0 0.0
    %308 = vmatprep.subr.mxu0 0.0
    %309 = vmatpush1.msra.mxu0 0.0
    %310 = vmatprep.subr.mxu0 0.0
    %311 = vmatpush1.msra.mxu0 0.0
    %312 = vmatprep.subr.mxu0 0.0
    %313 = vmatpush1.msra.mxu0 0.0
    %314 = vmatprep.subr.mxu0 0.0
    %315 = vmatpush1.msra.mxu0 0.0
    %316 = vmatprep.subr.mxu0 0.0
    %317 = vmatpush1.msra.mxu0 0.0
    %318 = vmatprep.subr.mxu0 0.0
    %319 = vmatpush1.msra.mxu0 0.0
    %320 = vmatprep.subr.mxu0 0.0
    %321 = vmatpush1.msra.mxu0 0.0
    %322 = vmatprep.subr.mxu0 0.0
    %323 = vmatpush1.msra.mxu0 0.0
    %324 = vmatprep.subr.mxu0 0.0
    %325 = vmatpush1.msra.mxu0 0.0
    %326 = vmatprep.subr.mxu0 0.0
    %327 = vmatpush1.msra.mxu0 0.0
    %328 = vmatprep.subr.mxu0 0.0
    %329 = vmatpush1.msra.mxu0 0.0
    %330 = vmatprep.subr.mxu0 0.0
    %331 = vmatpush1.msra.mxu0 0.0
    %332 = vmatprep.subr.mxu0 0.0
    %333 = vmatpush1.msra.mxu0 0.0
    %334 = vmatprep.mubr.f32.mxu0 0.0
    %335 = vmatmul.mubr.f32.gmra.mrb[0].mxu0 %v265
    %v336 = vpop.f32.mrb[0].mxu0
    %v337 = vadd.f32 %v261, %v336
    %v338 = vpop.f32.mrb[0].mxu0
    %339 = vmatprep.mubr.f32.mxu0 0.0
    %340 = vmatmul.mubr.f32.gmra.mrb[0].mxu0 %v268
    %v341 = vpop.f32.mrb[0].mxu0
    %v342 = vadd.f32 %v261, %v341
    %v343 = vpop.f32.mrb[0].mxu0
    %344 = vdwg.mxu0
    %v345 = vld [vmem:[#allocation13] sm:$0xff]
    %v346 = vld [vmem:[#allocation13 + $0x8] sm:$0xff]
    %v347 = vsub.f32 %v345, 1.0
    %v348 = vsub.f32 %v346, 1.0
    %v349 = vmul.f32 %v347, 1e+09
    %v350 = vmul.f32 %v348, 1e+09
    %352 = vset.pattern.permute.xlu0 0
    %353 = vperm.xlu0 %352, %v337
    %v354 = vpop.permute.xlu0 %353
    %357 = vset.pattern.permute.xlu0 0
    %358 = vperm.xlu0 %357, %v342
    %v359 = vpop.permute.xlu0 %358
    %v361 = vlaneseq
    %v362 = vshrl.u32 %v361, 7
    %v363 = vsub.s32 0, %v362
    %v364 = vrot.slane %v237, %v363
    %v365 = vadd.f32 %v354, %v364
    %v366 = vadd.f32 %v359, %v364
    %vm367 = vcmp.ge.f32.partialorder %v365, 0.0
    %vm368 = vcmp.ge.f32.partialorder %v366, 0.0
    %v369 = vmul.f32 %v365, 0.2
    %v370 = vmul.f32 %v366, 0.2
    %v371 = vsel %vm367, %v365, %v369
    %v372 = vsel %vm368, %v366, %v370
    %v373 = vadd.f32 %v371, %v349
    %v374 = vadd.f32 %v372, %v350
    %vm375 = vcmask 130048
    %v376 = vsel %vm375, %v373, -inf
    %377 = vmax.xlane.f32.xlu0 %v376
    %v378 = vpop.xlane.xlu0 %377
    %v379 = vsel %vm375, %v374, -inf
    %380 = vmax.xlane.f32.xlu0 %v379
    %v381 = vpop.xlane.xlu0 %380
    %v382 = vsub.f32 %v373, %v378
    %v383 = vsub.f32 %v374, %v381
    %v384 = vmul.f32 %v382, 1.442695
    %v385 = vpow.pop %v384
    %v386 = vmul.f32 %v383, 1.442695
    %v387 = vpow.pop %v386
    %v388 = vsel %vm375, %v385, 0.0
    %389 = vadd.xlane.f32.xlu0 %v388
    %v390 = vpop.xlane.xlu0 %389
    %v391 = vsel %vm375, %v387, 0.0
    %392 = vadd.xlane.f32.xlu0 %v391
    %v393 = vpop.xlane.xlu0 %392
    %v394 = vrcp.pop %v390
    %v395 = vmul.f32 1.0, %v394
    %v396 = vrcp.pop %v393
    %v397 = vmul.f32 1.0, %v396
    %v399 = vsel %vm375, %v385, 0
    %v402 = vsel %vm375, %v387, 0
    %404 = vmatprep.subr.mxu0 0.0
    %405 = vmatpush1.msra.mxu0 %v205
    %406 = vmatprep.subr.mxu0 0.0
    %407 = vmatpush1.msra.mxu0 %v210
    %408 = vmatprep.subr.mxu0 0.0
    %409 = vmatpush1.msra.mxu0 0.0
    %410 = vmatprep.subr.mxu0 0.0
    %411 = vmatpush1.msra.mxu0 0.0
    %412 = vmatprep.subr.mxu0 0.0
    %413 = vmatpush1.msra.mxu0 0.0
    %414 = vmatprep.subr.mxu0 0.0
    %415 = vmatpush1.msra.mxu0 0.0
    %416 = vmatprep.subr.mxu0 0.0
    %417 = vmatpush1.msra.mxu0 0.0
    %418 = vmatprep.subr.mxu0 0.0
    %419 = vmatpush1.msra.mxu0 0.0
    %420 = vmatprep.subr.mxu0 0.0
    %421 = vmatpush1.msra.mxu0 0.0
    %422 = vmatprep.subr.mxu0 0.0
    %423 = vmatpush1.msra.mxu0 0.0
    %424 = vmatprep.subr.mxu0 0.0
    %425 = vmatpush1.msra.mxu0 0.0
    %426 = vmatprep.subr.mxu0 0.0
    %427 = vmatpush1.msra.mxu0 0.0
    %428 = vmatprep.subr.mxu0 0.0
    %429 = vmatpush1.msra.mxu0 0.0
    %430 = vmatprep.subr.mxu0 0.0
    %431 = vmatpush1.msra.mxu0 0.0
    %432 = vmatprep.subr.mxu0 0.0
    %433 = vmatpush1.msra.mxu0 0.0
    %434 = vmatprep.subr.mxu0 0.0
    %435 = vmatpush1.msra.mxu0 0.0
    %436 = vmatprep.subr.mxu0 0.0
    %437 = vmatpush1.msra.mxu0 0.0
    %438 = vmatprep.subr.mxu0 0.0
    %439 = vmatpush1.msra.mxu0 0.0
    %440 = vmatprep.subr.mxu0 0.0
    %441 = vmatpush1.msra.mxu0 0.0
    %442 = vmatprep.subr.mxu0 0.0
    %443 = vmatpush1.msra.mxu0 0.0
    %444 = vmatprep.subr.mxu0 0.0
    %445 = vmatpush1.msra.mxu0 0.0
    %446 = vmatprep.subr.mxu0 0.0
    %447 = vmatpush1.msra.mxu0 0.0
    %448 = vmatprep.subr.mxu0 0.0
    %449 = vmatpush1.msra.mxu0 0.0
    %450 = vmatprep.subr.mxu0 0.0
    %451 = vmatpush1.msra.mxu0 0.0
    %452 = vmatprep.subr.mxu0 0.0
    %453 = vmatpush1.msra.mxu0 0.0
    %454 = vmatprep.subr.mxu0 0.0
    %455 = vmatpush1.msra.mxu0 0.0
    %456 = vmatprep.subr.mxu0 0.0
    %457 = vmatpush1.msra.mxu0 0.0
    %458 = vmatprep.subr.mxu0 0.0
    %459 = vmatpush1.msra.mxu0 0.0
    %460 = vmatprep.subr.mxu0 0.0
    %461 = vmatpush1.msra.mxu0 0.0
    %462 = vmatprep.subr.mxu0 0.0
    %463 = vmatpush1.msra.mxu0 0.0
    %464 = vmatprep.subr.mxu0 0.0
    %465 = vmatpush1.msra.mxu0 0.0
    %466 = vmatprep.subr.mxu0 0.0
    %467 = vmatpush1.msra.mxu0 0.0
    %468 = vmatprep.mubr.f32.mxu0 0.0
    %469 = vmatmul.mubr.f32.gmra.mrb[0].mxu0 %v399
    %v470 = vpop.f32.mrb[0].mxu0
    %v471 = vadd.f32 0.0, %v470
    %v472 = vpop.f32.mrb[0].mxu0
    %473 = vmatprep.mubr.f32.mxu0 0.0
    %474 = vmatmul.mubr.f32.gmra.mrb[0].mxu0 %v402
    %v475 = vpop.f32.mrb[0].mxu0
    %v476 = vadd.f32 0.0, %v475
    %v477 = vpop.f32.mrb[0].mxu0
    %478 = vdwg.mxu0
    %v479 = vmul.f32 %v471, %v395
    %v480 = vmul.f32 %v476, %v397
    %481 = vset.pattern.permute.xlu0 1
    %482 = vperm.xlu0 %481, %v337
    %v483 = vpop.permute.xlu0 %482
    %485 = vset.pattern.permute.xlu0 1
    %486 = vperm.xlu0 %485, %v342
    %v487 = vpop.permute.xlu0 %486
    %v489 = vlaneseq
    %v490 = vshrl.u32 %v489, 7
    %v491 = vsub.s32 1, %v490
    %v492 = vrot.slane %v237, %v491
    %v493 = vadd.f32 %v483, %v492
    %v494 = vadd.f32 %v487, %v492
    %vm495 = vcmp.ge.f32.partialorder %v493, 0.0
    %vm496 = vcmp.ge.f32.partialorder %v494, 0.0
    %v497 = vmul.f32 %v493, 0.2
    %v498 = vmul.f32 %v494, 0.2
    %v499 = vsel %vm495, %v493, %v497
    %v500 = vsel %vm496, %v494, %v498
    %v501 = vadd.f32 %v499, %v349
    %v502 = vadd.f32 %v500, %v350
    %v503 = vsel %vm375, %v501, -inf
    %504 = vmax.xlane.f32.xlu0 %v503
    %v505 = vpop.xlane.xlu0 %504
    %v506 = vsel %vm375, %v502, -inf
    %507 = vmax.xlane.f32.xlu0 %v506
    %v508 = vpop.xlane.xlu0 %507
    %v509 = vsub.f32 %v501, %v505
    %v510 = vsub.f32 %v502, %v508
    %v511 = vmul.f32 %v509, 1.442695
    %v512 = vpow.pop %v511
    %v513 = vmul.f32 %v510, 1.442695
    %v514 = vpow.pop %v513
    %v515 = vsel %vm375, %v512, 0.0
    %516 = vadd.xlane.f32.xlu0 %v515
    %v517 = vpop.xlane.xlu0 %516
    %v518 = vsel %vm375, %v514, 0.0
    %519 = vadd.xlane.f32.xlu0 %v518
    %v520 = vpop.xlane.xlu0 %519
    %v521 = vrcp.pop %v517
    %v522 = vmul.f32 1.0, %v521
    %v523 = vrcp.pop %v520
    %v524 = vmul.f32 1.0, %v523
    %525 = vrot.lane.b32.xlu0 %v205, 126
    %v526 = vpop.permute.xlu0 %525
    %527 = vrot.lane.b32.xlu0 %v210, 126
    %v528 = vpop.permute.xlu0 %527
    %v532 = vsel %vm375, %v512, 0
    %v535 = vsel %vm375, %v514, 0
    %537 = vmatprep.subr.mxu0 0.0
    %538 = vmatpush1.msra.mxu0 %v526
    %539 = vmatprep.subr.mxu0 0.0
    %540 = vmatpush1.msra.mxu0 %v528
    %541 = vmatprep.subr.mxu0 0.0
    %542 = vmatpush1.msra.mxu0 0.0
    %543 = vmatprep.subr.mxu0 0.0
    %544 = vmatpush1.msra.mxu0 0.0
    %545 = vmatprep.subr.mxu0 0.0
    %546 = vmatpush1.msra.mxu0 0.0
    %547 = vmatprep.subr.mxu0 0.0
    %548 = vmatpush1.msra.mxu0 0.0
    %549 = vmatprep.subr.mxu0 0.0
    %550 = vmatpush1.msra.mxu0 0.0
    %551 = vmatprep.subr.mxu0 0.0
    %552 = vmatpush1.msra.mxu0 0.0
    %553 = vmatprep.subr.mxu0 0.0
    %554 = vmatpush1.msra.mxu0 0.0
    %555 = vmatprep.subr.mxu0 0.0
    %556 = vmatpush1.msra.mxu0 0.0
    %557 = vmatprep.subr.mxu0 0.0
    %558 = vmatpush1.msra.mxu0 0.0
    %559 = vmatprep.subr.mxu0 0.0
    %560 = vmatpush1.msra.mxu0 0.0
    %561 = vmatprep.subr.mxu0 0.0
    %562 = vmatpush1.msra.mxu0 0.0
    %563 = vmatprep.subr.mxu0 0.0
    %564 = vmatpush1.msra.mxu0 0.0
    %565 = vmatprep.subr.mxu0 0.0
    %566 = vmatpush1.msra.mxu0 0.0
    %567 = vmatprep.subr.mxu0 0.0
    %568 = vmatpush1.msra.mxu0 0.0
    %569 = vmatprep.subr.mxu0 0.0
    %570 = vmatpush1.msra.mxu0 0.0
    %571 = vmatprep.subr.mxu0 0.0
    %572 = vmatpush1.msra.mxu0 0.0
    %573 = vmatprep.subr.mxu0 0.0
    %574 = vmatpush1.msra.mxu0 0.0
    %575 = vmatprep.subr.mxu0 0.0
    %576 = vmatpush1.msra.mxu0 0.0
    %577 = vmatprep.subr.mxu0 0.0
    %578 = vmatpush1.msra.mxu0 0.0
    %579 = vmatprep.subr.mxu0 0.0
    %580 = vmatpush1.msra.mxu0 0.0
    %581 = vmatprep.subr.mxu0 0.0
    %582 = vmatpush1.msra.mxu0 0.0
    %583 = vmatprep.subr.mxu0 0.0
    %584 = vmatpush1.msra.mxu0 0.0
    %585 = vmatprep.subr.mxu0 0.0
    %586 = vmatpush1.msra.mxu0 0.0
    %587 = vmatprep.subr.mxu0 0.0
    %588 = vmatpush1.msra.mxu0 0.0
    %589 = vmatprep.subr.mxu0 0.0
    %590 = vmatpush1.msra.mxu0 0.0
    %591 = vmatprep.subr.mxu0 0.0
    %592 = vmatpush1.msra.mxu0 0.0
    %593 = vmatprep.subr.mxu0 0.0
    %594 = vmatpush1.msra.mxu0 0.0
    %595 = vmatprep.subr.mxu0 0.0
    %596 = vmatpush1.msra.mxu0 0.0
    %597 = vmatprep.subr.mxu0 0.0
    %598 = vmatpush1.msra.mxu0 0.0
    %599 = vmatprep.subr.mxu0 0.0
    %600 = vmatpush1.msra.mxu0 0.0
    %601 = vmatprep.mubr.f32.mxu0 0.0
    %602 = vmatmul.mubr.f32.gmra.mrb[0].mxu0 %v532
    %v603 = vpop.f32.mrb[0].mxu0
    %v604 = vadd.f32 0.0, %v603
    %v605 = vpop.f32.mrb[0].mxu0
    %606 = vmatprep.mubr.f32.mxu0 0.0
    %607 = vmatmul.mubr.f32.gmra.mrb[0].mxu0 %v535
    %v608 = vpop.f32.mrb[0].mxu0
    %v609 = vadd.f32 0.0, %v608
    %v610 = vpop.f32.mrb[0].mxu0
    %611 = vdwg.mxu0
    %v612 = vmul.f32 %v604, %v522
    %v613 = vmul.f32 %v609, %v524
    %614 = vset.pattern.permute.xlu0 2
    %615 = vperm.xlu0 %614, %v337
    %v616 = vpop.permute.xlu0 %615
    %618 = vset.pattern.permute.xlu0 2
    %619 = vperm.xlu0 %618, %v342
    %v620 = vpop.permute.xlu0 %619
    %v622 = vlaneseq
    %v623 = vshrl.u32 %v622, 7
    %v624 = vsub.s32 2, %v623
    %v625 = vrot.slane %v237, %v624
    %v626 = vadd.f32 %v616, %v625
    %v627 = vadd.f32 %v620, %v625
    %vm628 = vcmp.ge.f32.partialorder %v626, 0.0
    %vm629 = vcmp.ge.f32.partialorder %v627, 0.0
    %v630 = vmul.f32 %v626, 0.2
    %v631 = vmul.f32 %v627, 0.2
    %v632 = vsel %vm628, %v626, %v630
    %v633 = vsel %vm629, %v627, %v631
    %v634 = vadd.f32 %v632, %v349
    %v635 = vadd.f32 %v633, %v350
    %v636 = vsel %vm375, %v634, -inf
    %637 = vmax.xlane.f32.xlu0 %v636
    %v638 = vpop.xlane.xlu0 %637
    %v639 = vsel %vm375, %v635, -inf
    %640 = vmax.xlane.f32.xlu0 %v639
    %v641 = vpop.xlane.xlu0 %640
    %v642 = vsub.f32 %v634, %v638
    %v643 = vsub.f32 %v635, %v641
    %v644 = vmul.f32 %v642, 1.442695
    %v645 = vpow.pop %v644
    %v646 = vmul.f32 %v643, 1.442695
    %v647 = vpow.pop %v646
    %v648 = vsel %vm375, %v645, 0.0
    %649 = vadd.xlane.f32.xlu0 %v648
    %v650 = vpop.xlane.xlu0 %649
    %v651 = vsel %vm375, %v647, 0.0
    %652 = vadd.xlane.f32.xlu0 %v651
    %v653 = vpop.xlane.xlu0 %652
    %v654 = vrcp.pop %v650
    %v655 = vmul.f32 1.0, %v654
    %v656 = vrcp.pop %v653
    %v657 = vmul.f32 1.0, %v656
    %658 = vrot.lane.b32.xlu0 %v205, 124
    %v659 = vpop.permute.xlu0 %658
    %660 = vrot.lane.b32.xlu0 %v210, 124
    %v661 = vpop.permute.xlu0 %660
    %v665 = vsel %vm375, %v645, 0
    %v668 = vsel %vm375, %v647, 0
    %670 = vmatprep.subr.mxu0 0.0
    %671 = vmatpush1.msra.mxu0 %v659
    %672 = vmatprep.subr.mxu0 0.0
    %673 = vmatpush1.msra.mxu0 %v661
    %674 = vmatprep.subr.mxu0 0.0
    %675 = vmatpush1.msra.mxu0 0.0
    %676 = vmatprep.subr.mxu0 0.0
    %677 = vmatpush1.msra.mxu0 0.0
    %678 = vmatprep.subr.mxu0 0.0
    %679 = vmatpush1.msra.mxu0 0.0
    %680 = vmatprep.subr.mxu0 0.0
    %681 = vmatpush1.msra.mxu0 0.0
    %682 = vmatprep.subr.mxu0 0.0
    %683 = vmatpush1.msra.mxu0 0.0
    %684 = vmatprep.subr.mxu0 0.0
    %685 = vmatpush1.msra.mxu0 0.0
    %686 = vmatprep.subr.mxu0 0.0
    %687 = vmatpush1.msra.mxu0 0.0
    %688 = vmatprep.subr.mxu0 0.0
    %689 = vmatpush1.msra.mxu0 0.0
    %690 = vmatprep.subr.mxu0 0.0
    %691 = vmatpush1.msra.mxu0 0.0
    %692 = vmatprep.subr.mxu0 0.0
    %693 = vmatpush1.msra.mxu0 0.0
    %694 = vmatprep.subr.mxu0 0.0
    %695 = vmatpush1.msra.mxu0 0.0
    %696 = vmatprep.subr.mxu0 0.0
    %697 = vmatpush1.msra.mxu0 0.0
    %698 = vmatprep.subr.mxu0 0.0
    %699 = vmatpush1.msra.mxu0 0.0
    %700 = vmatprep.subr.mxu0 0.0
    %701 = vmatpush1.msra.mxu0 0.0
    %702 = vmatprep.subr.mxu0 0.0
    %703 = vmatpush1.msra.mxu0 0.0
    %704 = vmatprep.subr.mxu0 0.0
    %705 = vmatpush1.msra.mxu0 0.0
    %706 = vmatprep.subr.mxu0 0.0
    %707 = vmatpush1.msra.mxu0 0.0
    %708 = vmatprep.subr.mxu0 0.0
    %709 = vmatpush1.msra.mxu0 0.0
    %710 = vmatprep.subr.mxu0 0.0
    %711 = vmatpush1.msra.mxu0 0.0
    %712 = vmatprep.subr.mxu0 0.0
    %713 = vmatpush1.msra.mxu0 0.0
    %714 = vmatprep.subr.mxu0 0.0
    %715 = vmatpush1.msra.mxu0 0.0
    %716 = vmatprep.subr.mxu0 0.0
    %717 = vmatpush1.msra.mxu0 0.0
    %718 = vmatprep.subr.mxu0 0.0
    %719 = vmatpush1.msra.mxu0 0.0
    %720 = vmatprep.subr.mxu0 0.0
    %721 = vmatpush1.msra.mxu0 0.0
    %722 = vmatprep.subr.mxu0 0.0
    %723 = vmatpush1.msra.mxu0 0.0
    %724 = vmatprep.subr.mxu0 0.0
    %725 = vmatpush1.msra.mxu0 0.0
    %726 = vmatprep.subr.mxu0 0.0
    %727 = vmatpush1.msra.mxu0 0.0
    %728 = vmatprep.subr.mxu0 0.0
    %729 = vmatpush1.msra.mxu0 0.0
    %730 = vmatprep.subr.mxu0 0.0
    %731 = vmatpush1.msra.mxu0 0.0
    %732 = vmatprep.subr.mxu0 0.0
    %733 = vmatpush1.msra.mxu0 0.0
    %734 = vmatprep.mubr.f32.mxu0 0.0
    %735 = vmatmul.mubr.f32.gmra.mrb[0].mxu0 %v665
    %v736 = vpop.f32.mrb[0].mxu0
    %v737 = vadd.f32 0.0, %v736
    %v738 = vpop.f32.mrb[0].mxu0
    %739 = vmatprep.mubr.f32.mxu0 0.0
    %740 = vmatmul.mubr.f32.gmra.mrb[0].mxu0 %v668
    %v741 = vpop.f32.mrb[0].mxu0
    %v742 = vadd.f32 0.0, %v741
    %v743 = vpop.f32.mrb[0].mxu0
    %744 = vdwg.mxu0
    %v745 = vmul.f32 %v737, %v655
    %v746 = vmul.f32 %v742, %v657
    %747 = vset.pattern.permute.xlu0 3
    %748 = vperm.xlu0 %747, %v337
    %v749 = vpop.permute.xlu0 %748
    %751 = vset.pattern.permute.xlu0 3
    %752 = vperm.xlu0 %751, %v342
    %v753 = vpop.permute.xlu0 %752
    %v755 = vlaneseq
    %v756 = vshrl.u32 %v755, 7
    %v757 = vsub.s32 3, %v756
    %v758 = vrot.slane %v237, %v757
    %v759 = vadd.f32 %v749, %v758
    %v760 = vadd.f32 %v753, %v758
    %vm761 = vcmp.ge.f32.partialorder %v759, 0.0
    %vm762 = vcmp.ge.f32.partialorder %v760, 0.0
    %v763 = vmul.f32 %v759, 0.2
    %v764 = vmul.f32 %v760, 0.2
    %v765 = vsel %vm761, %v759, %v763
    %v766 = vsel %vm762, %v760, %v764
    %v767 = vadd.f32 %v765, %v349
    %v768 = vadd.f32 %v766, %v350
    %v769 = vsel %vm375, %v767, -inf
    %770 = vmax.xlane.f32.xlu0 %v769
    %v771 = vpop.xlane.xlu0 %770
    %v772 = vsel %vm375, %v768, -inf
    %773 = vmax.xlane.f32.xlu0 %v772
    %v774 = vpop.xlane.xlu0 %773
    %v775 = vsub.f32 %v767, %v771
    %v776 = vsub.f32 %v768, %v774
    %v777 = vmul.f32 %v775, 1.442695
    %v778 = vpow.pop %v777
    %v779 = vmul.f32 %v776, 1.442695
    %v780 = vpow.pop %v779
    %v781 = vsel %vm375, %v778, 0.0
    %782 = vadd.xlane.f32.xlu0 %v781
    %v783 = vpop.xlane.xlu0 %782
    %v784 = vsel %vm375, %v780, 0.0
    %785 = vadd.xlane.f32.xlu0 %v784
    %v786 = vpop.xlane.xlu0 %785
    %v787 = vrcp.pop %v783
    %v788 = vmul.f32 1.0, %v787
    %v789 = vrcp.pop %v786
    %v790 = vmul.f32 1.0, %v789
    %791 = vrot.lane.b32.xlu0 %v205, 122
    %v792 = vpop.permute.xlu0 %791
    %793 = vrot.lane.b32.xlu0 %v210, 122
    %v794 = vpop.permute.xlu0 %793
    %v798 = vsel %vm375, %v778, 0
    %v801 = vsel %vm375, %v780, 0
    %803 = vmatprep.subr.mxu0 0.0
    %804 = vmatpush1.msra.mxu0 %v792
    %805 = vmatprep.subr.mxu0 0.0
    %806 = vmatpush1.msra.mxu0 %v794
    %807 = vmatprep.subr.mxu0 0.0
    %808 = vmatpush1.msra.mxu0 0.0
    %809 = vmatprep.subr.mxu0 0.0
    %810 = vmatpush1.msra.mxu0 0.0
    %811 = vmatprep.subr.mxu0 0.0
    %812 = vmatpush1.msra.mxu0 0.0
    %813 = vmatprep.subr.mxu0 0.0
    %814 = vmatpush1.msra.mxu0 0.0
    %815 = vmatprep.subr.mxu0 0.0
    %816 = vmatpush1.msra.mxu0 0.0
    %817 = vmatprep.subr.mxu0 0.0
    %818 = vmatpush1.msra.mxu0 0.0
    %819 = vmatprep.subr.mxu0 0.0
    %820 = vmatpush1.msra.mxu0 0.0
    %821 = vmatprep.subr.mxu0 0.0
    %822 = vmatpush1.msra.mxu0 0.0
    %823 = vmatprep.subr.mxu0 0.0
    %824 = vmatpush1.msra.mxu0 0.0
    %825 = vmatprep.subr.mxu0 0.0
    %826 = vmatpush1.msra.mxu0 0.0
    %827 = vmatprep.subr.mxu0 0.0
    %828 = vmatpush1.msra.mxu0 0.0
    %829 = vmatprep.subr.mxu0 0.0
    %830 = vmatpush1.msra.mxu0 0.0
    %831 = vmatprep.subr.mxu0 0.0
    %832 = vmatpush1.msra.mxu0 0.0
    %833 = vmatprep.subr.mxu0 0.0
    %834 = vmatpush1.msra.mxu0 0.0
    %835 = vmatprep.subr.mxu0 0.0
    %836 = vmatpush1.msra.mxu0 0.0
    %837 = vmatprep.subr.mxu0 0.0
    %838 = vmatpush1.msra.mxu0 0.0
    %839 = vmatprep.subr.mxu0 0.0
    %840 = vmatpush1.msra.mxu0 0.0
    %841 = vmatprep.subr.mxu0 0.0
    %842 = vmatpush1.msra.mxu0 0.0
    %843 = vmatprep.subr.mxu0 0.0
    %844 = vmatpush1.msra.mxu0 0.0
    %845 = vmatprep.subr.mxu0 0.0
    %846 = vmatpush1.msra.mxu0 0.0
    %847 = vmatprep.subr.mxu0 0.0
    %848 = vmatpush1.msra.mxu0 0.0
    %849 = vmatprep.subr.mxu0 0.0
    %850 = vmatpush1.msra.mxu0 0.0
    %851 = vmatprep.subr.mxu0 0.0
    %852 = vmatpush1.msra.mxu0 0.0
    %853 = vmatprep.subr.mxu0 0.0
    %854 = vmatpush1.msra.mxu0 0.0
    %855 = vmatprep.subr.mxu0 0.0
    %856 = vmatpush1.msra.mxu0 0.0
    %857 = vmatprep.subr.mxu0 0.0
    %858 = vmatpush1.msra.mxu0 0.0
    %859 = vmatprep.subr.mxu0 0.0
    %860 = vmatpush1.msra.mxu0 0.0
    %861 = vmatprep.subr.mxu0 0.0
    %862 = vmatpush1.msra.mxu0 0.0
    %863 = vmatprep.subr.mxu0 0.0
    %864 = vmatpush1.msra.mxu0 0.0
    %865 = vmatprep.subr.mxu0 0.0
    %866 = vmatpush1.msra.mxu0 0.0
    %867 = vmatprep.mubr.f32.mxu0 0.0
    %868 = vmatmul.mubr.f32.gmra.mrb[0].mxu0 %v798
    %v869 = vpop.f32.mrb[0].mxu0
    %v870 = vadd.f32 0.0, %v869
    %v871 = vpop.f32.mrb[0].mxu0
    %872 = vmatprep.mubr.f32.mxu0 0.0
    %873 = vmatmul.mubr.f32.gmra.mrb[0].mxu0 %v801
    %v874 = vpop.f32.mrb[0].mxu0
    %v875 = vadd.f32 0.0, %v874
    %v876 = vpop.f32.mrb[0].mxu0
    %877 = vdwg.mxu0
    %v878 = vmul.f32 %v870, %v788
    %v879 = vmul.f32 %v875, %v790
    %880 = vset.pattern.permute.xlu0 4
    %881 = vperm.xlu0 %880, %v337
    %v882 = vpop.permute.xlu0 %881
    %884 = vset.pattern.permute.xlu0 4
    %885 = vperm.xlu0 %884, %v342
    %v886 = vpop.permute.xlu0 %885
    %v888 = vlaneseq
    %v889 = vshrl.u32 %v888, 7
    %v890 = vsub.s32 4, %v889
    %v891 = vrot.slane %v237, %v890
    %v892 = vadd.f32 %v882, %v891
    %v893 = vadd.f32 %v886, %v891
    %vm894 = vcmp.ge.f32.partialorder %v892, 0.0
    %vm895 = vcmp.ge.f32.partialorder %v893, 0.0
    %v896 = vmul.f32 %v892, 0.2
    %v897 = vmul.f32 %v893, 0.2
    %v898 = vsel %vm894, %v892, %v896
    %v899 = vsel %vm895, %v893, %v897
    %v900 = vadd.f32 %v898, %v349
    %v901 = vadd.f32 %v899, %v350
    %v902 = vsel %vm375, %v900, -inf
    %903 = vmax.xlane.f32.xlu0 %v902
    %v904 = vpop.xlane.xlu0 %903
    %v905 = vsel %vm375, %v901, -inf
    %906 = vmax.xlane.f32.xlu0 %v905
    %v907 = vpop.xlane.xlu0 %906
    %v908 = vsub.f32 %v900, %v904
    %v909 = vsub.f32 %v901, %v907
    %v910 = vmul.f32 %v908, 1.442695
    %v911 = vpow.pop %v910
    %v912 = vmul.f32 %v909, 1.442695
    %v913 = vpow.pop %v912
    %v914 = vsel %vm375, %v911, 0.0
    %915 = vadd.xlane.f32.xlu0 %v914
    %v916 = vpop.xlane.xlu0 %915
    %v917 = vsel %vm375, %v913, 0.0
    %918 = vadd.xlane.f32.xlu0 %v917
    %v919 = vpop.xlane.xlu0 %918
    %v920 = vrcp.pop %v916
    %v921 = vmul.f32 1.0, %v920
    %v922 = vrcp.pop %v919
    %v923 = vmul.f32 1.0, %v922
    %924 = vrot.lane.b32.xlu0 %v205, 120
    %v925 = vpop.permute.xlu0 %924
    %926 = vrot.lane.b32.xlu0 %v210, 120
    %v927 = vpop.permute.xlu0 %926
    %v931 = vsel %vm375, %v911, 0
    %v934 = vsel %vm375, %v913, 0
    %936 = vmatprep.subr.mxu0 0.0
    %937 = vmatpush1.msra.mxu0 %v925
    %938 = vmatprep.subr.mxu0 0.0
    %939 = vmatpush1.msra.mxu0 %v927
    %940 = vmatprep.subr.mxu0 0.0
    %941 = vmatpush1.msra.mxu0 0.0
    %942 = vmatprep.subr.mxu0 0.0
    %943 = vmatpush1.msra.mxu0 0.0
    %944 = vmatprep.subr.mxu0 0.0
    %945 = vmatpush1.msra.mxu0 0.0
    %946 = vmatprep.subr.mxu0 0.0
    %947 = vmatpush1.msra.mxu0 0.0
    %948 = vmatprep.subr.mxu0 0.0
    %949 = vmatpush1.msra.mxu0 0.0
    %950 = vmatprep.subr.mxu0 0.0
    %951 = vmatpush1.msra.mxu0 0.0
    %952 = vmatprep.subr.mxu0 0.0
    %953 = vmatpush1.msra.mxu0 0.0
    %954 = vmatprep.subr.mxu0 0.0
    %955 = vmatpush1.msra.mxu0 0.0
    %956 = vmatprep.subr.mxu0 0.0
    %957 = vmatpush1.msra.mxu0 0.0
    %958 = vmatprep.subr.mxu0 0.0
    %959 = vmatpush1.msra.mxu0 0.0
    %960 = vmatprep.subr.mxu0 0.0
    %961 = vmatpush1.msra.mxu0 0.0
    %962 = vmatprep.subr.mxu0 0.0
    %963 = vmatpush1.msra.mxu0 0.0
    %964 = vmatprep.subr.mxu0 0.0
    %965 = vmatpush1.msra.mxu0 0.0
    %966 = vmatprep.subr.mxu0 0.0
    %967 = vmatpush1.msra.mxu0 0.0
    %968 = vmatprep.subr.mxu0 0.0
    %969 = vmatpush1.msra.mxu0 0.0
    %970 = vmatprep.subr.mxu0 0.0
    %971 = vmatpush1.msra.mxu0 0.0
    %972 = vmatprep.subr.mxu0 0.0
    %973 = vmatpush1.msra.mxu0 0.0
    %974 = vmatprep.subr.mxu0 0.0
    %975 = vmatpush1.msra.mxu0 0.0
    %976 = vmatprep.subr.mxu0 0.0
    %977 = vmatpush1.msra.mxu0 0.0
    %978 = vmatprep.subr.mxu0 0.0
    %979 = vmatpush1.msra.mxu0 0.0
    %980 = vmatprep.subr.mxu0 0.0
    %981 = vmatpush1.msra.mxu0 0.0
    %982 = vmatprep.subr.mxu0 0.0
    %983 = vmatpush1.msra.mxu0 0.0
    %984 = vmatprep.subr.mxu0 0.0
    %985 = vmatpush1.msra.mxu0 0.0
    %986 = vmatprep.subr.mxu0 0.0
    %987 = vmatpush1.msra.mxu0 0.0
    %988 = vmatprep.subr.mxu0 0.0
    %989 = vmatpush1.msra.mxu0 0.0
    %990 = vmatprep.subr.mxu0 0.0
    %991 = vmatpush1.msra.mxu0 0.0
    %992 = vmatprep.subr.mxu0 0.0
    %993 = vmatpush1.msra.mxu0 0.0
    %994 = vmatprep.subr.mxu0 0.0
    %995 = vmatpush1.msra.mxu0 0.0
    %996 = vmatprep.subr.mxu0 0.0
    %997 = vmatpush1.msra.mxu0 0.0
    %998 = vmatprep.subr.mxu0 0.0
    %999 = vmatpush1.msra.mxu0 0.0
    %1000 = vmatprep.mubr.f32.mxu0 0.0
    %1001 = vmatmul.mubr.f32.gmra.mrb[0].mxu0 %v931
    %v1002 = vpop.f32.mrb[0].mxu0
    %v1003 = vadd.f32 0.0, %v1002
    %v1004 = vpop.f32.mrb[0].mxu0
    %1005 = vmatprep.mubr.f32.mxu0 0.0
    %1006 = vmatmul.mubr.f32.gmra.mrb[0].mxu0 %v934
    %v1007 = vpop.f32.mrb[0].mxu0
    %v1008 = vadd.f32 0.0, %v1007
    %v1009 = vpop.f32.mrb[0].mxu0
    %1010 = vdwg.mxu0
    %v1011 = vmul.f32 %v1003, %v921
    %v1012 = vmul.f32 %v1008, %v923
    %1013 = vset.pattern.permute.xlu0 5
    %1014 = vperm.xlu0 %1013, %v337
    %v1015 = vpop.permute.xlu0 %1014
    %1017 = vset.pattern.permute.xlu0 5
    %1018 = vperm.xlu0 %1017, %v342
    %v1019 = vpop.permute.xlu0 %1018
    %v1021 = vlaneseq
    %v1022 = vshrl.u32 %v1021, 7
    %v1023 = vsub.s32 5, %v1022
    %v1024 = vrot.slane %v237, %v1023
    %v1025 = vadd.f32 %v1015, %v1024
    %v1026 = vadd.f32 %v1019, %v1024
    %vm1027 = vcmp.ge.f32.partialorder %v1025, 0.0
    %vm1028 = vcmp.ge.f32.partialorder %v1026, 0.0
    %v1029 = vmul.f32 %v1025, 0.2
    %v1030 = vmul.f32 %v1026, 0.2
    %v1031 = vsel %vm1027, %v1025, %v1029
    %v1032 = vsel %vm1028, %v1026, %v1030
    %v1033 = vadd.f32 %v1031, %v349
    %v1034 = vadd.f32 %v1032, %v350
    %v1035 = vsel %vm375, %v1033, -inf
    %1036 = vmax.xlane.f32.xlu0 %v1035
    %v1037 = vpop.xlane.xlu0 %1036
    %v1038 = vsel %vm375, %v1034, -inf
    %1039 = vmax.xlane.f32.xlu0 %v1038
    %v1040 = vpop.xlane.xlu0 %1039
    %v1041 = vsub.f32 %v1033, %v1037
    %v1042 = vsub.f32 %v1034, %v1040
    %v1043 = vmul.f32 %v1041, 1.442695
    %v1044 = vpow.pop %v1043
    %v1045 = vmul.f32 %v1042, 1.442695
    %v1046 = vpow.pop %v1045
    %v1047 = vsel %vm375, %v1044, 0.0
    %1048 = vadd.xlane.f32.xlu0 %v1047
    %v1049 = vpop.xlane.xlu0 %1048
    %v1050 = vsel %vm375, %v1046, 0.0
    %1051 = vadd.xlane.f32.xlu0 %v1050
    %v1052 = vpop.xlane.xlu0 %1051
    %v1053 = vrcp.pop %v1049
    %v1054 = vmul.f32 1.0, %v1053
    %v1055 = vrcp.pop %v1052
    %v1056 = vmul.f32 1.0, %v1055
    %1057 = vrot.lane.b32.xlu0 %v205, 118
    %v1058 = vpop.permute.xlu0 %1057
    %1059 = vrot.lane.b32.xlu0 %v210, 118
    %v1060 = vpop.permute.xlu0 %1059
    %v1064 = vsel %vm375, %v1044, 0
    %v1067 = vsel %vm375, %v1046, 0
    %1069 = vmatprep.subr.mxu0 0.0
    %1070 = vmatpush1.msra.mxu0 %v1058
    %1071 = vmatprep.subr.mxu0 0.0
    %1072 = vmatpush1.msra.mxu0 %v1060
    %1073 = vmatprep.subr.mxu0 0.0
    %1074 = vmatpush1.msra.mxu0 0.0
    %1075 = vmatprep.subr.mxu0 0.0
    %1076 = vmatpush1.msra.mxu0 0.0
    %1077 = vmatprep.subr.mxu0 0.0
    %1078 = vmatpush1.msra.mxu0 0.0
    %1079 = vmatprep.subr.mxu0 0.0
    %1080 = vmatpush1.msra.mxu0 0.0
    %1081 = vmatprep.subr.mxu0 0.0
    %1082 = vmatpush1.msra.mxu0 0.0
    %1083 = vmatprep.subr.mxu0 0.0
    %1084 = vmatpush1.msra.mxu0 0.0
    %1085 = vmatprep.subr.mxu0 0.0
    %1086 = vmatpush1.msra.mxu0 0.0
    %1087 = vmatprep.subr.mxu0 0.0
    %1088 = vmatpush1.msra.mxu0 0.0
    %1089 = vmatprep.subr.mxu0 0.0
    %1090 = vmatpush1.msra.mxu0 0.0
    %1091 = vmatprep.subr.mxu0 0.0
    %1092 = vmatpush1.msra.mxu0 0.0
    %1093 = vmatprep.subr.mxu0 0.0
    %1094 = vmatpush1.msra.mxu0 0.0
    %1095 = vmatprep.subr.mxu0 0.0
    %1096 = vmatpush1.msra.mxu0 0.0
    %1097 = vmatprep.subr.mxu0 0.0
    %1098 = vmatpush1.msra.mxu0 0.0
    %1099 = vmatprep.subr.mxu0 0.0
    %1100 = vmatpush1.msra.mxu0 0.0
    %1101 = vmatprep.subr.mxu0 0.0
    %1102 = vmatpush1.msra.mxu0 0.0
    %1103 = vmatprep.subr.mxu0 0.0
    %1104 = vmatpush1.msra.mxu0 0.0
    %1105 = vmatprep.subr.mxu0 0.0
    %1106 = vmatpush1.msra.mxu0 0.0
    %1107 = vmatprep.subr.mxu0 0.0
    %1108 = vmatpush1.msra.mxu0 0.0
    %1109 = vmatprep.subr.mxu0 0.0
    %1110 = vmatpush1.msra.mxu0 0.0
    %1111 = vmatprep.subr.mxu0 0.0
    %1112 = vmatpush1.msra.mxu0 0.0
    %1113 = vmatprep.subr.mxu0 0.0
    %1114 = vmatpush1.msra.mxu0 0.0
    %1115 = vmatprep.subr.mxu0 0.0
    %1116 = vmatpush1.msra.mxu0 0.0
    %1117 = vmatprep.subr.mxu0 0.0
    %1118 = vmatpush1.msra.mxu0 0.0
    %1119 = vmatprep.subr.mxu0 0.0
    %1120 = vmatpush1.msra.mxu0 0.0
    %1121 = vmatprep.subr.mxu0 0.0
    %1122 = vmatpush1.msra.mxu0 0.0
    %1123 = vmatprep.subr.mxu0 0.0
    %1124 = vmatpush1.msra.mxu0 0.0
    %1125 = vmatprep.subr.mxu0 0.0
    %1126 = vmatpush1.msra.mxu0 0.0
    %1127 = vmatprep.subr.mxu0 0.0
    %1128 = vmatpush1.msra.mxu0 0.0
    %1129 = vmatprep.subr.mxu0 0.0
    %1130 = vmatpush1.msra.mxu0 0.0
    %1131 = vmatprep.subr.mxu0 0.0
    %1132 = vmatpush1.msra.mxu0 0.0
    %1133 = vmatprep.mubr.f32.mxu0 0.0
    %1134 = vmatmul.mubr.f32.gmra.mrb[0].mxu0 %v1064
    %v1135 = vpop.f32.mrb[0].mxu0
    %v1136 = vadd.f32 0.0, %v1135
    %v1137 = vpop.f32.mrb[0].mxu0
    %1138 = vmatprep.mubr.f32.mxu0 0.0
    %1139 = vmatmul.mubr.f32.gmra.mrb[0].mxu0 %v1067
    %v1140 = vpop.f32.mrb[0].mxu0
    %v1141 = vadd.f32 0.0, %v1140
    %v1142 = vpop.f32.mrb[0].mxu0
    %1143 = vdwg.mxu0
    %v1144 = vmul.f32 %v1136, %v1054
    %v1145 = vmul.f32 %v1141, %v1056
    %1146 = vset.pattern.permute.xlu0 6
    %1147 = vperm.xlu0 %1146, %v337
    %v1148 = vpop.permute.xlu0 %1147
    %1150 = vset.pattern.permute.xlu0 6
    %1151 = vperm.xlu0 %1150, %v342
    %v1152 = vpop.permute.xlu0 %1151
    %v1154 = vlaneseq
    %v1155 = vshrl.u32 %v1154, 7
    %v1156 = vsub.s32 6, %v1155
    %v1157 = vrot.slane %v237, %v1156
    %v1158 = vadd.f32 %v1148, %v1157
    %v1159 = vadd.f32 %v1152, %v1157
    %vm1160 = vcmp.ge.f32.partialorder %v1158, 0.0
    %vm1161 = vcmp.ge.f32.partialorder %v1159, 0.0
    %v1162 = vmul.f32 %v1158, 0.2
    %v1163 = vmul.f32 %v1159, 0.2
    %v1164 = vsel %vm1160, %v1158, %v1162
    %v1165 = vsel %vm1161, %v1159, %v1163
    %v1166 = vadd.f32 %v1164, %v349
    %v1167 = vadd.f32 %v1165, %v350
    %v1168 = vsel %vm375, %v1166, -inf
    %1169 = vmax.xlane.f32.xlu0 %v1168
    %v1170 = vpop.xlane.xlu0 %1169
    %v1171 = vsel %vm375, %v1167, -inf
    %1172 = vmax.xlane.f32.xlu0 %v1171
    %v1173 = vpop.xlane.xlu0 %1172
    %v1174 = vsub.f32 %v1166, %v1170
    %v1175 = vsub.f32 %v1167, %v1173
    %v1176 = vmul.f32 %v1174, 1.442695
    %v1177 = vpow.pop %v1176
    %v1178 = vmul.f32 %v1175, 1.442695
    %v1179 = vpow.pop %v1178
    %v1180 = vsel %vm375, %v1177, 0.0
    %1181 = vadd.xlane.f32.xlu0 %v1180
    %v1182 = vpop.xlane.xlu0 %1181
    %v1183 = vsel %vm375, %v1179, 0.0
    %1184 = vadd.xlane.f32.xlu0 %v1183
    %v1185 = vpop.xlane.xlu0 %1184
    %v1186 = vrcp.pop %v1182
    %v1187 = vmul.f32 1.0, %v1186
    %v1188 = vrcp.pop %v1185
    %v1189 = vmul.f32 1.0, %v1188
    %1190 = vrot.lane.b32.xlu0 %v205, 116
    %v1191 = vpop.permute.xlu0 %1190
    %1192 = vrot.lane.b32.xlu0 %v210, 116
    %v1193 = vpop.permute.xlu0 %1192
    %v1197 = vsel %vm375, %v1177, 0
    %v1200 = vsel %vm375, %v1179, 0
    %1202 = vmatprep.subr.mxu0 0.0
    %1203 = vmatpush1.msra.mxu0 %v1191
    %1204 = vmatprep.subr.mxu0 0.0
    %1205 = vmatpush1.msra.mxu0 %v1193
    %1206 = vmatprep.subr.mxu0 0.0
    %1207 = vmatpush1.msra.mxu0 0.0
    %1208 = vmatprep.subr.mxu0 0.0
    %1209 = vmatpush1.msra.mxu0 0.0
    %1210 = vmatprep.subr.mxu0 0.0
    %1211 = vmatpush1.msra.mxu0 0.0
    %1212 = vmatprep.subr.mxu0 0.0
    %1213 = vmatpush1.msra.mxu0 0.0
    %1214 = vmatprep.subr.mxu0 0.0
    %1215 = vmatpush1.msra.mxu0 0.0
    %1216 = vmatprep.subr.mxu0 0.0
    %1217 = vmatpush1.msra.mxu0 0.0
    %1218 = vmatprep.subr.mxu0 0.0
    %1219 = vmatpush1.msra.mxu0 0.0
    %1220 = vmatprep.subr.mxu0 0.0
    %1221 = vmatpush1.msra.mxu0 0.0
    %1222 = vmatprep.subr.mxu0 0.0
    %1223 = vmatpush1.msra.mxu0 0.0
    %1224 = vmatprep.subr.mxu0 0.0
    %1225 = vmatpush1.msra.mxu0 0.0
    %1226 = vmatprep.subr.mxu0 0.0
    %1227 = vmatpush1.msra.mxu0 0.0
    %1228 = vmatprep.subr.mxu0 0.0
    %1229 = vmatpush1.msra.mxu0 0.0
    %1230 = vmatprep.subr.mxu0 0.0
    %1231 = vmatpush1.msra.mxu0 0.0
    %1232 = vmatprep.subr.mxu0 0.0
    %1233 = vmatpush1.msra.mxu0 0.0
    %1234 = vmatprep.subr.mxu0 0.0
    %1235 = vmatpush1.msra.mxu0 0.0
    %1236 = vmatprep.subr.mxu0 0.0
    %1237 = vmatpush1.msra.mxu0 0.0
    %1238 = vmatprep.subr.mxu0 0.0
    %1239 = vmatpush1.msra.mxu0 0.0
    %1240 = vmatprep.subr.mxu0 0.0
    %1241 = vmatpush1.msra.mxu0 0.0
    %1242 = vmatprep.subr.mxu0 0.0
    %1243 = vmatpush1.msra.mxu0 0.0
    %1244 = vmatprep.subr.mxu0 0.0
    %1245 = vmatpush1.msra.mxu0 0.0
    %1246 = vmatprep.subr.mxu0 0.0
    %1247 = vmatpush1.msra.mxu0 0.0
    %1248 = vmatprep.subr.mxu0 0.0
    %1249 = vmatpush1.msra.mxu0 0.0
    %1250 = vmatprep.subr.mxu0 0.0
    %1251 = vmatpush1.msra.mxu0 0.0
    %1252 = vmatprep.subr.mxu0 0.0
    %1253 = vmatpush1.msra.mxu0 0.0
    %1254 = vmatprep.subr.mxu0 0.0
    %1255 = vmatpush1.msra.mxu0 0.0
    %1256 = vmatprep.subr.mxu0 0.0
    %1257 = vmatpush1.msra.mxu0 0.0
    %1258 = vmatprep.subr.mxu0 0.0
    %1259 = vmatpush1.msra.mxu0 0.0
    %1260 = vmatprep.subr.mxu0 0.0
    %1261 = vmatpush1.msra.mxu0 0.0
    %1262 = vmatprep.subr.mxu0 0.0
    %1263 = vmatpush1.msra.mxu0 0.0
    %1264 = vmatprep.subr.mxu0 0.0
    %1265 = vmatpush1.msra.mxu0 0.0
    %1266 = vmatprep.mubr.f32.mxu0 0.0
    %1267 = vmatmul.mubr.f32.gmra.mrb[0].mxu0 %v1197
    %v1268 = vpop.f32.mrb[0].mxu0
    %v1269 = vadd.f32 0.0, %v1268
    %v1270 = vpop.f32.mrb[0].mxu0
    %1271 = vmatprep.mubr.f32.mxu0 0.0
    %1272 = vmatmul.mubr.f32.gmra.mrb[0].mxu0 %v1200
    %v1273 = vpop.f32.mrb[0].mxu0
    %v1274 = vadd.f32 0.0, %v1273
    %v1275 = vpop.f32.mrb[0].mxu0
    %1276 = vdwg.mxu0
    %v1277 = vmul.f32 %v1269, %v1187
    %v1278 = vmul.f32 %v1274, %v1189
    %1279 = vset.pattern.permute.xlu0 7
    %1280 = vperm.xlu0 %1279, %v337
    %v1281 = vpop.permute.xlu0 %1280
    %1283 = vset.pattern.permute.xlu0 7
    %1284 = vperm.xlu0 %1283, %v342
    %v1285 = vpop.permute.xlu0 %1284
    %v1287 = vlaneseq
    %v1288 = vshrl.u32 %v1287, 7
    %v1289 = vsub.s32 7, %v1288
    %v1290 = vrot.slane %v237, %v1289
    %v1291 = vadd.f32 %v1281, %v1290
    %v1292 = vadd.f32 %v1285, %v1290
    %vm1293 = vcmp.ge.f32.partialorder %v1291, 0.0
    %vm1294 = vcmp.ge.f32.partialorder %v1292, 0.0
    %v1295 = vmul.f32 %v1291, 0.2
    %v1296 = vmul.f32 %v1292, 0.2
    %v1297 = vsel %vm1293, %v1291, %v1295
    %v1298 = vsel %vm1294, %v1292, %v1296
    %v1299 = vadd.f32 %v1297, %v349
    %v1300 = vadd.f32 %v1298, %v350
    %v1301 = vsel %vm375, %v1299, -inf
    %1302 = vmax.xlane.f32.xlu0 %v1301
    %v1303 = vpop.xlane.xlu0 %1302
    %v1304 = vsel %vm375, %v1300, -inf
    %1305 = vmax.xlane.f32.xlu0 %v1304
    %v1306 = vpop.xlane.xlu0 %1305
    %v1307 = vsub.f32 %v1299, %v1303
    %v1308 = vsub.f32 %v1300, %v1306
    %v1309 = vmul.f32 %v1307, 1.442695
    %v1310 = vpow.pop %v1309
    %v1311 = vmul.f32 %v1308, 1.442695
    %v1312 = vpow.pop %v1311
    %v1313 = vsel %vm375, %v1310, 0.0
    %1314 = vadd.xlane.f32.xlu0 %v1313
    %v1315 = vpop.xlane.xlu0 %1314
    %v1316 = vsel %vm375, %v1312, 0.0
    %1317 = vadd.xlane.f32.xlu0 %v1316
    %v1318 = vpop.xlane.xlu0 %1317
    %v1319 = vrcp.pop %v1315
    %v1320 = vmul.f32 1.0, %v1319
    %v1321 = vrcp.pop %v1318
    %v1322 = vmul.f32 1.0, %v1321
    %1323 = vrot.lane.b32.xlu0 %v205, 114
    %v1324 = vpop.permute.xlu0 %1323
    %1325 = vrot.lane.b32.xlu0 %v210, 114
    %v1326 = vpop.permute.xlu0 %1325
    %v1330 = vsel %vm375, %v1310, 0
    %v1333 = vsel %vm375, %v1312, 0
    %1335 = vmatprep.subr.mxu0 0.0
    %1336 = vmatpush1.msra.mxu0 %v1324
    %1337 = vmatprep.subr.mxu0 0.0
    %1338 = vmatpush1.msra.mxu0 %v1326
    %1339 = vmatprep.subr.mxu0 0.0
    %1340 = vmatpush1.msra.mxu0 0.0
    %1341 = vmatprep.subr.mxu0 0.0
    %1342 = vmatpush1.msra.mxu0 0.0
    %1343 = vmatprep.subr.mxu0 0.0
    %1344 = vmatpush1.msra.mxu0 0.0
    %1345 = vmatprep.subr.mxu0 0.0
    %1346 = vmatpush1.msra.mxu0 0.0
    %1347 = vmatprep.subr.mxu0 0.0
    %1348 = vmatpush1.msra.mxu0 0.0
    %1349 = vmatprep.subr.mxu0 0.0
    %1350 = vmatpush1.msra.mxu0 0.0
    %1351 = vmatprep.subr.mxu0 0.0
    %1352 = vmatpush1.msra.mxu0 0.0
    %1353 = vmatprep.subr.mxu0 0.0
    %1354 = vmatpush1.msra.mxu0 0.0
    %1355 = vmatprep.subr.mxu0 0.0
    %1356 = vmatpush1.msra.mxu0 0.0
    %1357 = vmatprep.subr.mxu0 0.0
    %1358 = vmatpush1.msra.mxu0 0.0
    %1359 = vmatprep.subr.mxu0 0.0
    %1360 = vmatpush1.msra.mxu0 0.0
    %1361 = vmatprep.subr.mxu0 0.0
    %1362 = vmatpush1.msra.mxu0 0.0
    %1363 = vmatprep.subr.mxu0 0.0
    %1364 = vmatpush1.msra.mxu0 0.0
    %1365 = vmatprep.subr.mxu0 0.0
    %1366 = vmatpush1.msra.mxu0 0.0
    %1367 = vmatprep.subr.mxu0 0.0
    %1368 = vmatpush1.msra.mxu0 0.0
    %1369 = vmatprep.subr.mxu0 0.0
    %1370 = vmatpush1.msra.mxu0 0.0
    %1371 = vmatprep.subr.mxu0 0.0
    %1372 = vmatpush1.msra.mxu0 0.0
    %1373 = vmatprep.subr.mxu0 0.0
    %1374 = vmatpush1.msra.mxu0 0.0
    %1375 = vmatprep.subr.mxu0 0.0
    %1376 = vmatpush1.msra.mxu0 0.0
    %1377 = vmatprep.subr.mxu0 0.0
    %1378 = vmatpush1.msra.mxu0 0.0
    %1379 = vmatprep.subr.mxu0 0.0
    %1380 = vmatpush1.msra.mxu0 0.0
    %1381 = vmatprep.subr.mxu0 0.0
    %1382 = vmatpush1.msra.mxu0 0.0
    %1383 = vmatprep.subr.mxu0 0.0
    %1384 = vmatpush1.msra.mxu0 0.0
    %1385 = vmatprep.subr.mxu0 0.0
    %1386 = vmatpush1.msra.mxu0 0.0
    %1387 = vmatprep.subr.mxu0 0.0
    %1388 = vmatpush1.msra.mxu0 0.0
    %1389 = vmatprep.subr.mxu0 0.0
    %1390 = vmatpush1.msra.mxu0 0.0
    %1391 = vmatprep.subr.mxu0 0.0
    %1392 = vmatpush1.msra.mxu0 0.0
    %1393 = vmatprep.subr.mxu0 0.0
    %1394 = vmatpush1.msra.mxu0 0.0
    %1395 = vmatprep.subr.mxu0 0.0
    %1396 = vmatpush1.msra.mxu0 0.0
    %1397 = vmatprep.subr.mxu0 0.0
    %1398 = vmatpush1.msra.mxu0 0.0
    %1399 = vmatprep.mubr.f32.mxu0 0.0
    %1400 = vmatmul.mubr.f32.gmra.mrb[0].mxu0 %v1330
    %v1401 = vpop.f32.mrb[0].mxu0
    %v1402 = vadd.f32 0.0, %v1401
    %v1403 = vpop.f32.mrb[0].mxu0
    %1404 = vmatprep.mubr.f32.mxu0 0.0
    %1405 = vmatmul.mubr.f32.gmra.mrb[0].mxu0 %v1333
    %v1406 = vpop.f32.mrb[0].mxu0
    %v1407 = vadd.f32 0.0, %v1406
    %v1408 = vpop.f32.mrb[0].mxu0
    %1409 = vdwg.mxu0
    %v1410 = vmul.f32 %v1402, %v1320
    %v1411 = vmul.f32 %v1407, %v1322
    %1414 = vrot.lane.b32.xlu0 %v612, 2
    %v1415 = vpop.permute.xlu0 %1414
    %1416 = vrot.lane.b32.xlu0 %v613, 2
    %v1417 = vpop.permute.xlu0 %1416
    %1422 = vrot.lane.b32.xlu0 %v745, 4
    %v1423 = vpop.permute.xlu0 %1422
    %1424 = vrot.lane.b32.xlu0 %v746, 4
    %v1425 = vpop.permute.xlu0 %1424
    %1430 = vrot.lane.b32.xlu0 %v878, 6
    %v1431 = vpop.permute.xlu0 %1430
    %1432 = vrot.lane.b32.xlu0 %v879, 6
    %v1433 = vpop.permute.xlu0 %1432
    %1438 = vrot.lane.b32.xlu0 %v1011, 8
    %v1439 = vpop.permute.xlu0 %1438
    %1440 = vrot.lane.b32.xlu0 %v1012, 8
    %v1441 = vpop.permute.xlu0 %1440
    %1446 = vrot.lane.b32.xlu0 %v1144, 10
    %v1447 = vpop.permute.xlu0 %1446
    %1448 = vrot.lane.b32.xlu0 %v1145, 10
    %v1449 = vpop.permute.xlu0 %1448
    %1454 = vrot.lane.b32.xlu0 %v1277, 12
    %v1455 = vpop.permute.xlu0 %1454
    %1456 = vrot.lane.b32.xlu0 %v1278, 12
    %v1457 = vpop.permute.xlu0 %1456
    %1462 = vrot.lane.b32.xlu0 %v1410, 14
    %v1463 = vpop.permute.xlu0 %1462
    %1464 = vrot.lane.b32.xlu0 %v1411, 14
    %v1465 = vpop.permute.xlu0 %1464
    %vm1468 = vcmask 15360
    %v1469 = vsel %vm1468, %v479, %v1415
    %v1470 = vsel %vm1468, %v480, %v1417
    %vm1471 = vcmask 31744
    %v1472 = vsel %vm1471, %v1469, %v1423
    %v1473 = vsel %vm1471, %v1470, %v1425
    %vm1474 = vcmask 48128
    %v1475 = vsel %vm1474, %v1472, %v1431
    %v1476 = vsel %vm1474, %v1473, %v1433
    %v1477 = vsel %vm263, %v1475, %v1439
    %v1478 = vsel %vm263, %v1476, %v1441
    %vm1479 = vcmask 80896
    %v1480 = vsel %vm1479, %v1477, %v1447
    %v1481 = vsel %vm1479, %v1478, %v1449
    %v1482 = vsel %vm127, %v1480, %v1455
    %v1483 = vsel %vm127, %v1481, %v1457
    %vm1484 = vcmask 113664
    %v1485 = vsel %vm1484, %v1482, %v1463
    %v1486 = vsel %vm1484, %v1483, %v1465
    %v1487 = vmax.f32 %v1485, 0.0
    %v1488 = vmax.f32 %v1486, 0.0
    %1489 = vst.msk [vmem:[#allocation14] sm:$0xff] %vm375, %v1487
    %1490 = vst.msk [vmem:[#allocation14 + $0x8] sm:$0xff] %vm375, %v1488
    // Predicated region
    $region58: #{tpu_custom_call.1} parent=1 // pred_check
      _
    $region59: #{tpu_custom_call.1} parent=1 // pred_check_branch
      %1492 = sbr.rel (0) target = $region61
    $region60: #{tpu_custom_call.1} parent=1 // pred_region
      %s1494 = ssub.s32 256, 256
      %1495 = vsyncadd [#allocation4], %s1494
      %s1496 = sshll.u32 [#allocation14], 4
      %s1497 = int_to_ptr.vmem [resolvable:$true] %s1496
      %1502 = dma.vmem_to_hbm [thread:$0]  %s1497, 256, %s7, [#allocation4], 128, 128, 8
    $region61: #{tpu_custom_call.1} parent=1 // pred_fallthru
      _
    // Predicated region
    $region62: #{tpu_custom_call.1} parent=1 // pred_check
      _
    $region63: #{tpu_custom_call.1} parent=1 // pred_check_branch
      %1504 = sbr.rel (0) target = $region65
    $region64: #{tpu_custom_call.1} parent=1 // pred_region
      %1505 = dma.done [#allocation4], 256
    $region65: #{tpu_custom_call.1} parent=1 // pred_fallthru
      _
    %1506 = vsyncpa [#allocation3], 1
    %1507 = vsyncpa [#allocation6], 1
    %1508 = vsyncpa [#allocation9], 1
    %1509 = vsyncpa [#allocation12], 1
    %1510 = vsyncpa [#allocation4], 1

</llo_original>
